<compile_context>
chip_gen: v5e
topology: v5e:2x2
jax: 0.10.0
libtpu: 0.0.40
codegen_flags: <defaults>
</compile_context>

<pallas_src>
import functools

import jax
import jax.numpy as jnp
from jax.experimental import pallas as pl
from jax.experimental.pallas import tpu as pltpu

VMEM_LIMIT_BYTES = 32 * 1024 * 1024   # well above actual use; fits v7x's 64 MiB VMEM
NEG_INF_MASK = -1e30                  # finite mask value keeps exp() well-defined


def _pick_tile(dim, cap, mult):
    """Largest tile <= cap that is a multiple of `mult` and divides dim exactly.

    Falls back to the full dimension (always a legal block) — no host-side padding.
    """
    if dim <= cap:
        return dim
    t = (cap // mult) * mult
    while t >= mult:
        if dim % t == 0:
            return t
        t -= mult
    return dim


# ----------------------------------------------------------------------------
# Linear (x @ W + b) kernel: tiled over rows (M) and output columns (N).
# bf16 operands, f32 accumulation on the MXU.
# ----------------------------------------------------------------------------
def _linear_kernel(x_ref, w_ref, b_ref, o_ref):
    x = x_ref[...].astype(jnp.bfloat16)
    w = w_ref[...].astype(jnp.bfloat16)
    acc = jnp.dot(x, w, preferred_element_type=jnp.float32)
    o_ref[...] = (acc + b_ref[...].astype(jnp.float32)).astype(o_ref.dtype)


def linear(x2, w, b=None, *, out_dtype=None, row_cap=256, col_cap=512):
    """x2: (M, K), w: (K, N), b: (N,) or None. Returns (M, N) in out_dtype."""
    M, K = x2.shape
    Kw, N = w.shape
    assert K == Kw
    out_dtype = out_dtype or x2.dtype
    if b is None:
        b = jnp.zeros((N,), jnp.float32)
    b2 = b.reshape(1, N)

    tm = _pick_tile(M, row_cap, 8)
    tn = _pick_tile(N, col_cap, 128)
    grid = (M // tm, N // tn)

    return pl.pallas_call(
        _linear_kernel,
        out_shape=jax.ShapeDtypeStruct((M, N), out_dtype),
        grid_spec=pltpu.PrefetchScalarGridSpec(
            num_scalar_prefetch=0,
            grid=grid,
            in_specs=[
                pl.BlockSpec((tm, K), lambda i, n: (i, 0)),
                pl.BlockSpec((K, tn), lambda i, n: (0, n)),
                pl.BlockSpec((1, tn), lambda i, n: (0, n)),
            ],
            out_specs=pl.BlockSpec((tm, tn), lambda i, n: (i, n)),
        ),
        compiler_params=pltpu.CompilerParams(
            dimension_semantics=("parallel", "parallel"),
            vmem_limit_bytes=VMEM_LIMIT_BYTES,
        ),
    )(x2, w, b2)


# ----------------------------------------------------------------------------
# Causal flash-attention kernel (online softmax), heads looped in-kernel.
# Reads q/k/v directly out of the fused (B, T, 3C) qkv tensor.
# ----------------------------------------------------------------------------
def _flash_causal_kernel(q_ref, k_ref, v_ref, o_ref, m_sc, l_sc, acc_sc, *,
                         scale, num_heads, head_dim):
    i = pl.program_id(1)          # q tile index
    j = pl.program_id(2)          # kv tile index (reduction axis)
    tq = q_ref.shape[1]
    tkv = k_ref.shape[1]
    q_start = i * tq
    k_start = j * tkv

    @pl.when(j == 0)
    def _():
        m_sc[...] = jnp.full(m_sc.shape, -jnp.inf, jnp.float32)
        l_sc[...] = jnp.zeros(l_sc.shape, jnp.float32)
        acc_sc[...] = jnp.zeros(acc_sc.shape, jnp.float32)

    def process(masked):
        if masked:
            rows = q_start + jax.lax.broadcasted_iota(jnp.int32, (tq, tkv), 0)
            cols = k_start + jax.lax.broadcasted_iota(jnp.int32, (tq, tkv), 1)
            causal = cols <= rows
        for h in range(num_heads):
            sl = pl.ds(h * head_dim, head_dim)
            # Fold the softmax scale into q (cheaper than scaling the (tq,tkv) scores).
            qh = (q_ref[0, :, sl].astype(jnp.float32) * scale).astype(jnp.bfloat16)
            kh = k_ref[0, :, sl].astype(jnp.bfloat16)
            vh = v_ref[0, :, sl].astype(jnp.bfloat16)
            s = jnp.dot(qh, kh.T, preferred_element_type=jnp.float32)   # (tq, tkv)
            if masked:
                s = jnp.where(causal, s, NEG_INF_MASK)
            m_prev = m_sc[h]                                            # (tq, 1)
            m_new = jnp.maximum(m_prev, s.max(axis=-1, keepdims=True))
            alpha = jnp.exp(m_prev - m_new)
            p = jnp.exp(s - m_new)
            l_sc[h] = alpha * l_sc[h] + p.sum(axis=-1, keepdims=True)
            acc_sc[:, sl] = alpha * acc_sc[:, sl] + jnp.dot(
                p.astype(jnp.bfloat16), vh, preferred_element_type=jnp.float32)
            m_sc[h] = m_new

    # Fully-below-diagonal blocks: no mask needed (fast path).
    @pl.when(j < i)
    def _():
        process(masked=False)

    # Diagonal block: build the causal mask.  Blocks with j > i are skipped entirely
    # (and their K/V DMAs are suppressed by the clamped index_map).
    @pl.when(j == i)
    def _():
        process(masked=True)

    @pl.when(j == pl.num_programs(2) - 1)
    def _():
        # Normalize each head's columns in scratch, then one lane-dense (tq, C) store.
        for h in range(num_heads):
            sl = pl.ds(h * head_dim, head_dim)
            acc_sc[:, sl] = acc_sc[:, sl] * pl.reciprocal(l_sc[h], approx=True)
        o_ref[0] = acc_sc[...].astype(o_ref.dtype)


def flash_causal_attention(qkv, *, num_heads, scale, tile_cap=256):
    """qkv: (B, T, 3C) fused tensor. Returns attention output (B, T, C)."""
    B, T, C3 = qkv.shape
    C = C3 // 3
    D = C // num_heads
    tq = _pick_tile(T, tile_cap, 16)
    tkv = tq
    grid = (B, T // tq, T // tkv)

    kernel = functools.partial(_flash_causal_kernel, scale=scale,
                               num_heads=num_heads, head_dim=D)
    return pl.pallas_call(
        kernel,
        out_shape=jax.ShapeDtypeStruct((B, T, C), qkv.dtype),
        grid_spec=pltpu.PrefetchScalarGridSpec(
            num_scalar_prefetch=0,
            grid=grid,
            in_specs=[
                # q / k / v are all windows of the same qkv array; the last-dim block
                # index (0 / 1 / 2) selects the region.  The kv block index for k/v is
                # clamped so causally-skipped blocks issue no new DMA.
                pl.BlockSpec((1, tq, C), lambda b, i, j: (b, i, 0)),
                pl.BlockSpec((1, tkv, C), lambda b, i, j: (b, jnp.minimum(j, i), 1)),
                pl.BlockSpec((1, tkv, C), lambda b, i, j: (b, jnp.minimum(j, i), 2)),
            ],
            out_specs=pl.BlockSpec((1, tq, C), lambda b, i, j: (b, i, 0)),
            scratch_shapes=[
                pltpu.VMEM((num_heads, tq, 1), jnp.float32),   # running max (per head)
                pltpu.VMEM((num_heads, tq, 1), jnp.float32),   # running denom (per head)
                pltpu.VMEM((tq, C), jnp.float32),              # output accumulator
            ],
        ),
        compiler_params=pltpu.CompilerParams(
            dimension_semantics=("parallel", "parallel", "arbitrary"),
            vmem_limit_bytes=VMEM_LIMIT_BYTES,
        ),
    )(qkv, qkv, qkv)


# ----------------------------------------------------------------------------
# Full module forward.
# ----------------------------------------------------------------------------
def causal_self_attention(x, w_qkv, w_proj, b_proj, *, num_heads):
    """x: (B, T, C); w_qkv: (C, 3C); w_proj: (C, C); b_proj: (C,)."""
    B, T, C = x.shape
    assert C % num_heads == 0, "n_embd must be divisible by num_heads"
    assert C % 128 == 0, "n_embd must be a multiple of 128 for lane-dense tiles"
    D = C // num_heads

    # QKV projection (bias=False in the reference module); keep activations in bf16.
    qkv = linear(x.reshape(B * T, C), w_qkv, out_dtype=jnp.bfloat16)
    qkv = qkv.reshape(B, T, 3 * C)

    # Scale matches the reference code literally: `* head_size ** 0.5`.
    scale = float(D) ** 0.5
    o = flash_causal_attention(qkv, num_heads=num_heads, scale=scale)   # (B, T, C) bf16

    # Output projection (with bias). Dropouts are identity in eval mode.
    out = linear(o.reshape(B * T, C), w_proj, b_proj, out_dtype=x.dtype)
    return out.reshape(B, T, C)


if __name__ == "__main__":
    key = jax.random.PRNGKey(0)
    B, T = 2, 256            # batch, seq (context_length = 256)
    C = 384                  # n_embd
    H = 6                    # num_heads
    D = C // H               # head_size = 64

    k1, k2, k3, k4 = jax.random.split(key, 4)
    x = jax.random.normal(k1, (B, T, C), dtype=jnp.float32)
    w_qkv = jax.random.normal(k2, (C, 3 * C), dtype=jnp.float32) * 0.02
    w_proj = jax.random.normal(k3, (C, C), dtype=jnp.float32) * 0.02
    b_proj = jax.random.normal(k4, (C,), dtype=jnp.float32) * 0.02

    y = causal_self_attention(x, w_qkv, w_proj, b_proj, num_heads=H)
    y = jax.block_until_ready(y)

    # ------------------- pure-JAX reference (eval-mode forward) -------------
    # Structural math matches the PyTorch module exactly; matmul operands are cast
    # to bfloat16 with f32 accumulation to mirror the kernel's precision policy
    # (per the perf review), so the comparison isolates structural correctness.
    def bdot(a, b):
        return jnp.matmul(a.astype(jnp.bfloat16), b.astype(jnp.bfloat16),
                          preferred_element_type=jnp.float32)

    qkv_r = bdot(x.reshape(B * T, C), w_qkv).astype(jnp.bfloat16)
    qkv_r = qkv_r.reshape(B, T, 3 * C).astype(jnp.float32)
    q_r, k_r, v_r = jnp.split(qkv_r, 3, axis=-1)
    q_r = q_r.reshape(B, T, H, D).transpose(0, 2, 1, 3)
    k_r = k_r.reshape(B, T, H, D).transpose(0, 2, 1, 3)
    v_r = v_r.reshape(B, T, H, D).transpose(0, 2, 1, 3)
    att = bdot(q_r, jnp.swapaxes(k_r, -1, -2)) * (float(D) ** 0.5)
    mask = jnp.tril(jnp.ones((T, T), dtype=bool))
    att = jnp.where(mask[None, None, :, :], att, -jnp.inf)
    att = jax.nn.softmax(att, axis=-1)
    out_r = bdot(att, v_r).astype(jnp.bfloat16)          # kernel keeps attn out in bf16
    out_r = out_r.transpose(0, 2, 1, 3).reshape(B * T, C).astype(jnp.float32)
    ref = (bdot(out_r, w_proj) + b_proj).reshape(B, T, C)

    assert jnp.allclose(y, ref, atol=1e-2, rtol=1e-2), "mismatch vs reference"
    print("KERNEL_OK")
</pallas_src>

<mosaic_0001>
module attributes {stable_mosaic.version = 11 : i64} {
  func.func @_linear_kernel(%arg0: i32, %arg1: i32, %arg2: memref<256x384xf32, #tpu.memory_space<vmem>>, %arg3: memref<384x384xf32, #tpu.memory_space<vmem>>, %arg4: memref<1x384xf32, #tpu.memory_space<vmem>>, %arg5: memref<256x384xbf16, #tpu.memory_space<vmem>>) attributes {dimension_semantics = [#tpu.dimension_semantics<parallel>, #tpu.dimension_semantics<parallel>], iteration_bounds = array<i64: 2, 3>, scalar_prefetch = 0 : i64, scratch_operands = 0 : i64, tpu.core_type = #tpu.core_type<tc>, window_params = [{transform_indices = @transform_0, window_bounds = array<i64: 256, 384>}, {transform_indices = @transform_1, window_bounds = array<i64: 384, 384>}, {transform_indices = @transform_2, window_bounds = array<i64: 1, 384>}, {transform_indices = @transform_3, window_bounds = array<i64: 256, 384>}]} {
    %c0 = arith.constant 0 : index
    %c0_0 = arith.constant 0 : index
    %0 = vector.load %arg2[%c0, %c0_0] : memref<256x384xf32, #tpu.memory_space<vmem>>, vector<256x384xf32>
    %1 = arith.truncf %0 : vector<256x384xf32> to vector<256x384xbf16>
    %c0_1 = arith.constant 0 : index
    %c0_2 = arith.constant 0 : index
    %2 = vector.load %arg3[%c0_1, %c0_2] : memref<384x384xf32, #tpu.memory_space<vmem>>, vector<384x384xf32>
    %3 = arith.truncf %2 : vector<384x384xf32> to vector<384x384xbf16>
    %cst = arith.constant dense<0.000000e+00> : vector<256x384xf32>
    %4 = tpu.matmul %1, %3, %cst {dimension_numbers = #tpu.dot_dimension_numbers<[1], [0], [0], [1], [0, 0, 1, 1], [], []>} : vector<256x384xbf16>, vector<384x384xbf16>, vector<256x384xf32> -> vector<256x384xf32>
    %c0_3 = arith.constant 0 : index
    %c0_4 = arith.constant 0 : index
    %5 = vector.load %arg4[%c0_3, %c0_4] : memref<1x384xf32, #tpu.memory_space<vmem>>, vector<1x384xf32>
    %6 = vector.broadcast %5 : vector<1x384xf32> to vector<256x384xf32>
    %7 = arith.addf %4, %6 : vector<256x384xf32>
    %8 = arith.truncf %7 : vector<256x384xf32> to vector<256x384xbf16>
    %c0_5 = arith.constant 0 : index
    %c0_6 = arith.constant 0 : index
    %9 = vector.load %arg5[%c0_5, %c0_6] : memref<256x384xbf16, #tpu.memory_space<vmem>>, vector<256x384xbf16>
    tpu.vector_store %arg5[%c0_5, %c0_6], %8 {strides = array<i32>} : memref<256x384xbf16, #tpu.memory_space<vmem>>, vector<256x384xbf16>,
    return
  }
  func.func @transform_0(%arg0: i32, %arg1: i32) -> (i32, i32) {
    %c0_i32 = arith.constant 0 : i32
    %c0_i32_0 = arith.constant 0 : i32
    return %arg0, %c0_i32 : i32, i32
  }
  func.func @transform_1(%arg0: i32, %arg1: i32) -> (i32, i32) {
    %c0_i32 = arith.constant 0 : i32
    %c0_i32_0 = arith.constant 0 : i32
    return %c0_i32, %arg1 : i32, i32
  }
  func.func @transform_2(%arg0: i32, %arg1: i32) -> (i32, i32) {
    %c0_i32 = arith.constant 0 : i32
    %c0_i32_0 = arith.constant 0 : i32
    return %c0_i32, %arg1 : i32, i32
  }
  func.func @transform_3(%arg0: i32, %arg1: i32) -> (i32, i32) {
    %c0_i32 = arith.constant 0 : i32
    return %arg0, %arg1 : i32, i32
  }
}

</mosaic_0001>

<llo_original>
// kernel: tpu_custom_call.1
$region0: #{tpu_custom_call.1}
  #allocation0 [shape = 'u32[]', space=smem, size = 0x4, offset = 0x4, fixed_abs, tag = 'smem constant byte address 0x4 - core index']
  #allocation1 [shape = 'u32[72,128]{1,0:T(1,128)}', space=vmem, size = 0x9000, scoped, tag = 'internal scratch']
  %s0 = inlined_call_operand.hbm [shape: f32[512,384], index: 0, kind: input, shape index: {}]
  %s1 = inlined_call_operand.hbm [shape: f32[384,1152], index: 1, kind: input, shape index: {}]
  %s2 = inlined_call_operand.hbm [shape: f32[1,1152], index: 2, kind: input, shape index: {}]
  %s3 = inlined_call_operand.hbm [shape: bf16[512,1152], index: 3, kind: output, shape index: {}]
  %s4 = sld [smem:[#allocation0]]
  $region57: #{tpu_custom_call.1} parent=0
    _
  %s6 = ssub.s32 1, %s4
  %s7 = scalar_select 0, %s6, %s4
  $region1: #{tpu_custom_call.1} parent=0
    #allocation2 [shape = 'u8[786432]{0}', space=vmem, size = 0xc0000, scoped, tag = 'input window, operand 0']
    #allocation3 [shape = 's32[2]{0}', space=sflag, size = 0x8, scoped, tag = 'scoped memory for tpu_custom_call.1']
    #allocation4 [shape = 's32[2]{0}', space=sflag, size = 0x8, scoped, tag = 'scoped memory for tpu_custom_call.1']
    #allocation5 [shape = 'u8[1179648]{0}', space=vmem, size = 0x120000, scoped, tag = 'input window, operand 1']
    #allocation6 [shape = 's32[2]{0}', space=sflag, size = 0x8, scoped, tag = 'scoped memory for tpu_custom_call.1']
    #allocation7 [shape = 'u8[3072]{0}', space=vmem, size = 0xc00, scoped, tag = 'input window, operand 2']
    #allocation8 [shape = 'u8[393216]{0}', space=vmem, size = 0x60000, scoped, tag = 'output window, operand 0']
    %8 = vsyncpa [#allocation3], 0
    %s9 = scalar_lea.sflag [#allocation3], 1
    %10 = vsyncpa %s9, 0
    %11 = vsyncpa [#allocation6], 0
    %s12 = scalar_lea.sflag [#allocation6], 1
    %13 = vsyncpa %s12, 0
    %14 = vsyncpa [#allocation4], 0
    %s15 = scalar_lea.sflag [#allocation4], 1
    %16 = vsyncpa %s15, 0
    loop: start=0, step=1, limit=8
    $region2: #{tpu_custom_call.1} parent=1 // loop_pre_header
      _
    $region3: #{tpu_custom_call.1} parent=1 // loop_header
      %s18 = sphi 0, %s22
      %p19 = scmp.ge.s32.totalorder %s18, 8
      %s25 = sphi 0, %s37
      %s26 = sphi 0, %s33
      %s27 = sphi 0, %s25
      %s28 = sphi 0, %s26
      %s29 = sphi 0, %s27
      %s30 = sphi 0, %s28
      %s40 = sphi 0, %s42
      %s43 = sphi 0, %s40
      %s44 = sphi 0, %s43
      %s60 = sphi 0, %s44
      %s66 = sphi 0, %s68
      %s69 = sphi 0, %s66
      %s70 = sphi 0, %s69
      %s86 = sphi 0, %s70
      %s92 = sphi 0, %s94
      %s95 = sphi 0, %s92
      %s96 = sphi 0, %s95
      %s112 = sphi 0, %s96
      %s120 = sphi 0, %s122
      %s123 = sphi 0, %s120
      %s124 = sphi 0, %s123
      %s140 = sphi 0, %s124
    $region4: #{tpu_custom_call.1} parent=1 // loop_header_branch
      %21 = sbr.rel (%p19) target = $region8
    $region5: #{tpu_custom_call.1} parent=1 // loop_body
      %s23 = ssub.s32 %s18, 1
      %s24 = ssub.s32 %s18, 2
      %s31 = sadd.s32 1, %s26
      %p32 = scmp.ge.s32.totalorder %s31, 3
      %s33 = scalar_select %p32, 0, %s31
      %s34 = sadd.s32 1, %s25
      %s35 = scalar_select %p32, %s34, %s25
      %p36 = scmp.ge.s32.totalorder %s35, 2
      %s37 = scalar_select %p36, 0, %s35
      %s38 = ssub.s32 %s25, %s37
      %p39 = scmp.eq.s32.totalorder %s38, 0
      %s41 = sadd.s32 %s40, 1
      %s42 = scalar_select %p39, %s40, %s41
      %p45 = pneg %p39
      %p46 = scmp.eq.s32.totalorder %s18, 5
      %p47 = por %p45, %p46
      %p48 = scmp.ne.s32.totalorder %s40, %s43
      %p49 = scmp.eq.s32.totalorder %s18, 0
      %p50 = por %p48, %p49
      %p51 = scmp.ne.s32.totalorder %s40, %s43
      %p52 = scmp.eq.s32.totalorder %s23, 5
      %p53 = por %p51, %p52
      %p54 = scmp.ne.s32.totalorder %s43, %s44
      %p55 = scmp.eq.s32.totalorder %s23, 0
      %p56 = por %p54, %p55
      %p57 = scmp.ne.s32.totalorder %s43, %s44
      %p58 = scmp.eq.s32.totalorder %s24, 5
      %p59 = por %p57, %p58
      %p61 = scmp.ne.s32.totalorder %s44, %s60
      %p62 = scmp.eq.s32.totalorder %s24, 0
      %p63 = por %p61, %p62
      %s64 = ssub.s32 %s26, %s33
      %p65 = scmp.eq.s32.totalorder %s64, 0
      %s67 = sadd.s32 %s66, 1
      %s68 = scalar_select %p65, %s66, %s67
      %p71 = pneg %p65
      %p72 = scmp.eq.s32.totalorder %s18, 5
      %p73 = por %p71, %p72
      %p74 = scmp.ne.s32.totalorder %s66, %s69
      %p75 = scmp.eq.s32.totalorder %s18, 0
      %p76 = por %p74, %p75
      %p77 = scmp.ne.s32.totalorder %s66, %s69
      %p78 = scmp.eq.s32.totalorder %s23, 5
      %p79 = por %p77, %p78
      %p80 = scmp.ne.s32.totalorder %s69, %s70
      %p81 = scmp.eq.s32.totalorder %s23, 0
      %p82 = por %p80, %p81
      %p83 = scmp.ne.s32.totalorder %s69, %s70
      %p84 = scmp.eq.s32.totalorder %s24, 5
      %p85 = por %p83, %p84
      %p87 = scmp.ne.s32.totalorder %s70, %s86
      %p88 = scmp.eq.s32.totalorder %s24, 0
      %p89 = por %p87, %p88
      %s90 = ssub.s32 %s26, %s33
      %p91 = scmp.eq.s32.totalorder %s90, 0
      %s93 = sadd.s32 %s92, 1
      %s94 = scalar_select %p91, %s92, %s93
      %p97 = pneg %p91
      %p98 = scmp.eq.s32.totalorder %s18, 5
      %p99 = por %p97, %p98
      %p100 = scmp.ne.s32.totalorder %s92, %s95
      %p101 = scmp.eq.s32.totalorder %s18, 0
      %p102 = por %p100, %p101
      %p103 = scmp.ne.s32.totalorder %s92, %s95
      %p104 = scmp.eq.s32.totalorder %s23, 5
      %p105 = por %p103, %p104
      %p106 = scmp.ne.s32.totalorder %s95, %s96
      %p107 = scmp.eq.s32.totalorder %s23, 0
      %p108 = por %p106, %p107
      %p109 = scmp.ne.s32.totalorder %s95, %s96
      %p110 = scmp.eq.s32.totalorder %s24, 5
      %p111 = por %p109, %p110
      %p113 = scmp.ne.s32.totalorder %s96, %s112
      %p114 = scmp.eq.s32.totalorder %s24, 0
      %p115 = por %p113, %p114
      %s116 = ssub.s32 %s25, %s37
      %s117 = ssub.s32 %s26, %s33
      %s118 = sor.u32 %s116, %s117
      %p119 = scmp.eq.s32.totalorder %s118, 0
      %s121 = sadd.s32 %s120, 1
      %s122 = scalar_select %p119, %s120, %s121
      %p125 = pneg %p119
      %p126 = scmp.eq.s32.totalorder %s18, 5
      %p127 = por %p125, %p126
      %p128 = scmp.ne.s32.totalorder %s120, %s123
      %p129 = scmp.eq.s32.totalorder %s18, 0
      %p130 = por %p128, %p129
      %p131 = scmp.ne.s32.totalorder %s120, %s123
      %p132 = scmp.eq.s32.totalorder %s23, 5
      %p133 = por %p131, %p132
      %p134 = scmp.ne.s32.totalorder %s123, %s124
      %p135 = scmp.eq.s32.totalorder %s23, 0
      %p136 = por %p134, %p135
      %p137 = scmp.ne.s32.totalorder %s123, %s124
      %p138 = scmp.eq.s32.totalorder %s24, 5
      %p139 = por %p137, %p138
      %p141 = scmp.ne.s32.totalorder %s124, %s140
      %p142 = scmp.eq.s32.totalorder %s24, 0
      %p143 = por %p141, %p142
      %p144 = scmp.le.s32.totalorder 1, %s18
      %p145 = scmp.lt.s32.totalorder %s18, 7
      %p146 = pnand %p144, %p145
      %p147 = pneg %p146
      // Predicated region
      $region9: #{tpu_custom_call.1} parent=5 // pred_check
        _
      $region10: #{tpu_custom_call.1} parent=5 // pred_check_branch
        %149 = sbr.rel (%p146) target = $region12
      $region11: #{tpu_custom_call.1} parent=5 // pred_region
        %s150 = ssub.s32 %s18, 1
      $region12: #{tpu_custom_call.1} parent=5 // pred_fallthru
        _
      %p151 = scmp.lt.s32.totalorder %s18, 6
      // Predicated region
      $region13: #{tpu_custom_call.1} parent=5 // pred_check
        %p152 = pneg %p151
      $region14: #{tpu_custom_call.1} parent=5 // pred_check_branch
        %154 = sbr.rel (%p152) target = $region16
      $region15: #{tpu_custom_call.1} parent=5 // pred_region
        // Predicated region
        $region17: #{tpu_custom_call.1} parent=15 // pred_check
          %p155 = pneg %p50
        $region18: #{tpu_custom_call.1} parent=15 // pred_check_branch
          %157 = sbr.rel (%p155) target = $region20
        $region19: #{tpu_custom_call.1} parent=15 // pred_region
          %s158 = sand.u32 %s40, 1
          %s159 = scalar_lea.sflag [#allocation3], %s158
          %s160 = sand.u32 %s40, 1
          %s161 = smul.addr %s160, 768
          %s162 = scalar_lea.vmem [#allocation2], %s161
          %s163 = smul.u32 32, %s25
          %165 = vsyncadd %s159, 0
          %s166 = smul.addr %s163, 3
          %s167 = smul.addr %s166, 8
          %s168 = scalar_lea.hbm %s0, %s167
          %s169 = sshll.u32 %s168, 4
          %s170 = int_to_ptr.hbm [resolvable:$true] %s169
          %s171 = sshll.u32 %s162, 4
          %s172 = int_to_ptr.vmem [resolvable:$true] %s171
          %177 = dma.hbm_to_vmem [thread:$0]  %s170, 12288, %s172, %s159, 384, 384, 24
        $region20: #{tpu_custom_call.1} parent=15 // pred_fallthru
          _
        // Predicated region
        $region21: #{tpu_custom_call.1} parent=15 // pred_check
          %p178 = pneg %p76
        $region22: #{tpu_custom_call.1} parent=15 // pred_check_branch
          %180 = sbr.rel (%p178) target = $region24
        $region23: #{tpu_custom_call.1} parent=15 // pred_region
          %s181 = sand.u32 %s18, 1
          %s182 = scalar_lea.sflag [#allocation6], %s181
          %s183 = sand.u32 %s66, 1
          %s184 = smul.addr %s183, 1152
          %s185 = scalar_lea.vmem [#allocation5], %s184
          %s186 = smul.u32 3, %s26
          %188 = vsyncadd %s182, 0
          %s189 = smul.addr %s186, 8
          %s190 = scalar_lea.hbm %s1, %s189
          %s191 = sshll.u32 %s190, 4
          %s192 = int_to_ptr.hbm [resolvable:$true] %s191
          %s193 = sshll.u32 %s185, 4
          %s194 = int_to_ptr.vmem [resolvable:$true] %s193
          %199 = dma.hbm_to_vmem [thread:$0]  %s192, 18432, %s194, %s182, 1152, 384, 24
        $region24: #{tpu_custom_call.1} parent=15 // pred_fallthru
          _
        // Predicated region
        $region25: #{tpu_custom_call.1} parent=15 // pred_check
          %p200 = pneg %p102
        $region26: #{tpu_custom_call.1} parent=15 // pred_check_branch
          %202 = sbr.rel (%p200) target = $region28
        $region27: #{tpu_custom_call.1} parent=15 // pred_region
          %s203 = sand.u32 %s18, 1
          %s204 = scalar_lea.sflag [#allocation6], %s203
          %s205 = sand.u32 %s92, 1
          %s206 = smul.addr %s205, 3
          %s207 = scalar_lea.vmem [#allocation7], %s206
          %s208 = smul.u32 3, %s26
          %210 = vsyncadd %s204, 0
          %s211 = scalar_lea.hbm %s2, %s208
          %s213 = sshll.u32 %s211, 4
          %s214 = int_to_ptr.hbm [resolvable:$true] %s213
          %s215 = sshll.u32 %s207, 4
          %s216 = int_to_ptr.vmem [resolvable:$true] %s215
          %218 = dma.hbm_to_vmem [thread:$0]  %s214, 48, %s216, %s204
        $region28: #{tpu_custom_call.1} parent=15 // pred_fallthru
          _
      $region16: #{tpu_custom_call.1} parent=5 // pred_fallthru
        _
      %p219 = scmp.le.s32.totalorder 1, %s18
      %p220 = scmp.lt.s32.totalorder %s18, 7
      %p221 = pnand %p219, %p220
      %p222 = pneg %p221
      // Predicated region
      $region29: #{tpu_custom_call.1} parent=5 // pred_check
        _
      $region30: #{tpu_custom_call.1} parent=5 // pred_check_branch
        %224 = sbr.rel (%p221) target = $region32
      $region31: #{tpu_custom_call.1} parent=5 // pred_region
        %s225 = ssub.s32 %s18, 1
        %s226 = sand.u32 %s43, 1
        %s227 = scalar_lea.sflag [#allocation3], %s226
        %s228 = sand.u32 %s43, 1
        %s229 = smul.addr %s228, 768
        %s230 = scalar_lea.vmem [#allocation2], %s229
        // Predicated region
        $region33: #{tpu_custom_call.1} parent=31 // pred_check
          %p231 = pneg %p56
        $region34: #{tpu_custom_call.1} parent=31 // pred_check_branch
          %233 = sbr.rel (%p231) target = $region36
        $region35: #{tpu_custom_call.1} parent=31 // pred_region
          %235 = dma.done %s227, 12288
        $region36: #{tpu_custom_call.1} parent=31 // pred_fallthru
          _
        %s236 = sand.u32 %s23, 1
        %s237 = scalar_lea.sflag [#allocation6], %s236
        %s238 = sand.u32 %s69, 1
        %s239 = smul.addr %s238, 1152
        %s240 = scalar_lea.vmem [#allocation5], %s239
        // Predicated region
        $region37: #{tpu_custom_call.1} parent=31 // pred_check
          %p241 = pneg %p82
        $region38: #{tpu_custom_call.1} parent=31 // pred_check_branch
          %243 = sbr.rel (%p241) target = $region40
        $region39: #{tpu_custom_call.1} parent=31 // pred_region
          %245 = dma.done %s237, 18432
        $region40: #{tpu_custom_call.1} parent=31 // pred_fallthru
          _
        %s246 = sand.u32 %s23, 1
        %s247 = scalar_lea.sflag [#allocation6], %s246
        %s248 = sand.u32 %s95, 1
        %s249 = smul.addr %s248, 3
        %s250 = scalar_lea.vmem [#allocation7], %s249
        // Predicated region
        $region41: #{tpu_custom_call.1} parent=31 // pred_check
          %p251 = pneg %p108
        $region42: #{tpu_custom_call.1} parent=31 // pred_check_branch
          %253 = sbr.rel (%p251) target = $region44
        $region43: #{tpu_custom_call.1} parent=31 // pred_region
          %255 = dma.done %s247, 48
        $region44: #{tpu_custom_call.1} parent=31 // pred_fallthru
          _
        %s256 = sand.u32 %s43, 1
        %s257 = scalar_lea.sflag [#allocation3], %s256
        %s258 = sand.u32 %s43, 1
        %s259 = smul.addr %s258, 768
        %s260 = scalar_lea.vmem [#allocation2], %s259
        %p261 = pneg %p56
        %p262 = pneg %p53
        %s263 = sand.u32 %s23, 1
        %s264 = scalar_lea.sflag [#allocation6], %s263
        %s265 = sand.u32 %s69, 1
        %s266 = smul.addr %s265, 1152
        %s267 = scalar_lea.vmem [#allocation5], %s266
        %p268 = pneg %p82
        %p269 = pneg %p79
        %s270 = sand.u32 %s23, 1
        %s271 = scalar_lea.sflag [#allocation6], %s270
        %s272 = sand.u32 %s95, 1
        %s273 = smul.addr %s272, 3
        %s274 = scalar_lea.vmem [#allocation7], %s273
        %p275 = pneg %p108
        %p276 = pneg %p105
        %p277 = pneg %p136
        %p278 = pneg %p133
        %s279 = sand.u32 %s123, 1
        %s280 = scalar_lea.sflag [#allocation4], %s279
        %s281 = sand.u32 %s123, 1
        %s282 = smul.addr %s281, 384
        %s283 = scalar_lea.vmem [#allocation8], %s282
        %s284 = smul.u32 32, %s27
        %s285 = smul.u32 3, %s28
        %s286 = smul.u32 3, %s28
        %s287 = smul.u32 32, %s27
        %s288 = smul.u32 3, %s28
        %v289 = vld [vmem:[%s230] sm:$0xff]
        %v290 = vld [vmem:[%s230 + $0x8] sm:$0xff]
        %v291 = vld [vmem:[%s230 + $0x10] sm:$0xff]
        %v292 = vld [vmem:[%s230 + $0x18] sm:$0xff]
        %v293 = vld [vmem:[%s230 + $0x20] sm:$0xff]
        %v294 = vld [vmem:[%s230 + $0x28] sm:$0xff]
        %v295 = vld [vmem:[%s230 + $0x30] sm:$0xff]
        %v296 = vld [vmem:[%s230 + $0x38] sm:$0xff]
        %v297 = vld [vmem:[%s230 + $0x40] sm:$0xff]
        %v298 = vld [vmem:[%s230 + $0x48] sm:$0xff]
        %v299 = vld [vmem:[%s230 + $0x50] sm:$0xff]
        %v300 = vld [vmem:[%s230 + $0x58] sm:$0xff]
        %v301 = vld [vmem:[%s230 + $0x60] sm:$0xff]
        %v302 = vld [vmem:[%s230 + $0x68] sm:$0xff]
        %v303 = vld [vmem:[%s230 + $0x70] sm:$0xff]
        %v304 = vld [vmem:[%s230 + $0x78] sm:$0xff]
        %v305 = vld [vmem:[%s230 + $0x80] sm:$0xff]
        %v306 = vld [vmem:[%s230 + $0x88] sm:$0xff]
        %v307 = vld [vmem:[%s230 + $0x90] sm:$0xff]
        %v308 = vld [vmem:[%s230 + $0x98] sm:$0xff]
        %v309 = vld [vmem:[%s230 + $0xa0] sm:$0xff]
        %v310 = vld [vmem:[%s230 + $0xa8] sm:$0xff]
        %v311 = vld [vmem:[%s230 + $0xb0] sm:$0xff]
        %v312 = vld [vmem:[%s230 + $0xb8] sm:$0xff]
        %v313 = vld [vmem:[%s230 + $0xc0] sm:$0xff]
        %v314 = vld [vmem:[%s230 + $0xc8] sm:$0xff]
        %v315 = vld [vmem:[%s230 + $0xd0] sm:$0xff]
        %v316 = vld [vmem:[%s230 + $0xd8] sm:$0xff]
        %v317 = vld [vmem:[%s230 + $0xe0] sm:$0xff]
        %v318 = vld [vmem:[%s230 + $0xe8] sm:$0xff]
        %v319 = vld [vmem:[%s230 + $0xf0] sm:$0xff]
        %v320 = vld [vmem:[%s230 + $0xf8] sm:$0xff]
        %v321 = vld [vmem:[%s230 + $0x100] sm:$0xff]
        %v322 = vld [vmem:[%s230 + $0x108] sm:$0xff]
        %v323 = vld [vmem:[%s230 + $0x110] sm:$0xff]
        %v324 = vld [vmem:[%s230 + $0x118] sm:$0xff]
        %v325 = vld [vmem:[%s230 + $0x120] sm:$0xff]
        %v326 = vld [vmem:[%s230 + $0x128] sm:$0xff]
        %v327 = vld [vmem:[%s230 + $0x130] sm:$0xff]
        %v328 = vld [vmem:[%s230 + $0x138] sm:$0xff]
        %v329 = vld [vmem:[%s230 + $0x140] sm:$0xff]
        %v330 = vld [vmem:[%s230 + $0x148] sm:$0xff]
        %v331 = vld [vmem:[%s230 + $0x150] sm:$0xff]
        %v332 = vld [vmem:[%s230 + $0x158] sm:$0xff]
        %v333 = vld [vmem:[%s230 + $0x160] sm:$0xff]
        %v334 = vld [vmem:[%s230 + $0x168] sm:$0xff]
        %v335 = vld [vmem:[%s230 + $0x170] sm:$0xff]
        %v336 = vld [vmem:[%s230 + $0x178] sm:$0xff]
        %v337 = vld [vmem:[%s230 + $0x180] sm:$0xff]
        %v338 = vld [vmem:[%s230 + $0x188] sm:$0xff]
        %v339 = vld [vmem:[%s230 + $0x190] sm:$0xff]
        %v340 = vld [vmem:[%s230 + $0x198] sm:$0xff]
        %v341 = vld [vmem:[%s230 + $0x1a0] sm:$0xff]
        %v342 = vld [vmem:[%s230 + $0x1a8] sm:$0xff]
        %v343 = vld [vmem:[%s230 + $0x1b0] sm:$0xff]
        %v344 = vld [vmem:[%s230 + $0x1b8] sm:$0xff]
        %v345 = vld [vmem:[%s230 + $0x1c0] sm:$0xff]
        %v346 = vld [vmem:[%s230 + $0x1c8] sm:$0xff]
        %v347 = vld [vmem:[%s230 + $0x1d0] sm:$0xff]
        %v348 = vld [vmem:[%s230 + $0x1d8] sm:$0xff]
        %v349 = vld [vmem:[%s230 + $0x1e0] sm:$0xff]
        %v350 = vld [vmem:[%s230 + $0x1e8] sm:$0xff]
        %v351 = vld [vmem:[%s230 + $0x1f0] sm:$0xff]
        %v352 = vld [vmem:[%s230 + $0x1f8] sm:$0xff]
        %v353 = vld [vmem:[%s230 + $0x200] sm:$0xff]
        %v354 = vld [vmem:[%s230 + $0x208] sm:$0xff]
        %v355 = vld [vmem:[%s230 + $0x210] sm:$0xff]
        %v356 = vld [vmem:[%s230 + $0x218] sm:$0xff]
        %v357 = vld [vmem:[%s230 + $0x220] sm:$0xff]
        %v358 = vld [vmem:[%s230 + $0x228] sm:$0xff]
        %v359 = vld [vmem:[%s230 + $0x230] sm:$0xff]
        %v360 = vld [vmem:[%s230 + $0x238] sm:$0xff]
        %v361 = vld [vmem:[%s230 + $0x240] sm:$0xff]
        %v362 = vld [vmem:[%s230 + $0x248] sm:$0xff]
        %v363 = vld [vmem:[%s230 + $0x250] sm:$0xff]
        %v364 = vld [vmem:[%s230 + $0x258] sm:$0xff]
        %v365 = vld [vmem:[%s230 + $0x260] sm:$0xff]
        %v366 = vld [vmem:[%s230 + $0x268] sm:$0xff]
        %v367 = vld [vmem:[%s230 + $0x270] sm:$0xff]
        %v368 = vld [vmem:[%s230 + $0x278] sm:$0xff]
        %v369 = vld [vmem:[%s230 + $0x280] sm:$0xff]
        %v370 = vld [vmem:[%s230 + $0x288] sm:$0xff]
        %v371 = vld [vmem:[%s230 + $0x290] sm:$0xff]
        %v372 = vld [vmem:[%s230 + $0x298] sm:$0xff]
        %v373 = vld [vmem:[%s230 + $0x2a0] sm:$0xff]
        %v374 = vld [vmem:[%s230 + $0x2a8] sm:$0xff]
        %v375 = vld [vmem:[%s230 + $0x2b0] sm:$0xff]
        %v376 = vld [vmem:[%s230 + $0x2b8] sm:$0xff]
        %v377 = vld [vmem:[%s230 + $0x2c0] sm:$0xff]
        %v378 = vld [vmem:[%s230 + $0x2c8] sm:$0xff]
        %v379 = vld [vmem:[%s230 + $0x2d0] sm:$0xff]
        %v380 = vld [vmem:[%s230 + $0x2d8] sm:$0xff]
        %v381 = vld [vmem:[%s230 + $0x2e0] sm:$0xff]
        %v382 = vld [vmem:[%s230 + $0x2e8] sm:$0xff]
        %v383 = vld [vmem:[%s230 + $0x2f0] sm:$0xff]
        %v384 = vld [vmem:[%s230 + $0x2f8] sm:$0xff]
        %v385 = vpack.c.bf16 %v292, %v289
        %v386 = vpack.c.bf16 %v293, %v290
        %v387 = vpack.c.bf16 %v294, %v291
        %v388 = vpack.c.bf16 %v298, %v295
        %v389 = vpack.c.bf16 %v299, %v296
        %v390 = vpack.c.bf16 %v300, %v297
        %v391 = vpack.c.bf16 %v304, %v301
        %v392 = vpack.c.bf16 %v305, %v302
        %v393 = vpack.c.bf16 %v306, %v303
        %v394 = vpack.c.bf16 %v310, %v307
        %v395 = vpack.c.bf16 %v311, %v308
        %v396 = vpack.c.bf16 %v312, %v309
        %v397 = vpack.c.bf16 %v316, %v313
        %v398 = vpack.c.bf16 %v317, %v314
        %v399 = vpack.c.bf16 %v318, %v315
        %v400 = vpack.c.bf16 %v322, %v319
        %v401 = vpack.c.bf16 %v323, %v320
        %v402 = vpack.c.bf16 %v324, %v321
        %v403 = vpack.c.bf16 %v328, %v325
        %v404 = vpack.c.bf16 %v329, %v326
        %v405 = vpack.c.bf16 %v330, %v327
        %v406 = vpack.c.bf16 %v334, %v331
        %v407 = vpack.c.bf16 %v335, %v332
        %v408 = vpack.c.bf16 %v336, %v333
        %v409 = vpack.c.bf16 %v340, %v337
        %v410 = vpack.c.bf16 %v341, %v338
        %v411 = vpack.c.bf16 %v342, %v339
        %v412 = vpack.c.bf16 %v346, %v343
        %v413 = vpack.c.bf16 %v347, %v344
        %v414 = vpack.c.bf16 %v348, %v345
        %v415 = vpack.c.bf16 %v352, %v349
        %v416 = vpack.c.bf16 %v353, %v350
        %v417 = vpack.c.bf16 %v354, %v351
        %v418 = vpack.c.bf16 %v358, %v355
        %v419 = vpack.c.bf16 %v359, %v356
        %v420 = vpack.c.bf16 %v360, %v357
        %v421 = vpack.c.bf16 %v364, %v361
        %v422 = vpack.c.bf16 %v365, %v362
        %v423 = vpack.c.bf16 %v366, %v363
        %v424 = vpack.c.bf16 %v370, %v367
        %v425 = vpack.c.bf16 %v371, %v368
        %v426 = vpack.c.bf16 %v372, %v369
        %v427 = vpack.c.bf16 %v376, %v373
        %v428 = vpack.c.bf16 %v377, %v374
        %v429 = vpack.c.bf16 %v378, %v375
        %v430 = vpack.c.bf16 %v382, %v379
        %v431 = vpack.c.bf16 %v383, %v380
        %v432 = vpack.c.bf16 %v384, %v381
        %v433 = vld [vmem:[%s240] sm:$0xff]
        %v434 = vld [vmem:[%s240 + $0x8] sm:$0xff]
        %v435 = vld [vmem:[%s240 + $0x10] sm:$0xff]
        %v436 = vld [vmem:[%s240 + $0x18] sm:$0xff]
        %v437 = vld [vmem:[%s240 + $0x20] sm:$0xff]
        %v438 = vld [vmem:[%s240 + $0x28] sm:$0xff]
        %v439 = vld [vmem:[%s240 + $0x30] sm:$0xff]
        %v440 = vld [vmem:[%s240 + $0x38] sm:$0xff]
        %v441 = vld [vmem:[%s240 + $0x40] sm:$0xff]
        %v442 = vld [vmem:[%s240 + $0x48] sm:$0xff]
        %v443 = vld [vmem:[%s240 + $0x50] sm:$0xff]
        %v444 = vld [vmem:[%s240 + $0x58] sm:$0xff]
        %v445 = vld [vmem:[%s240 + $0x60] sm:$0xff]
        %v446 = vld [vmem:[%s240 + $0x68] sm:$0xff]
        %v447 = vld [vmem:[%s240 + $0x70] sm:$0xff]
        %v448 = vld [vmem:[%s240 + $0x78] sm:$0xff]
        %v449 = vld [vmem:[%s240 + $0x80] sm:$0xff]
        %v450 = vld [vmem:[%s240 + $0x88] sm:$0xff]
        %v451 = vld [vmem:[%s240 + $0x90] sm:$0xff]
        %v452 = vld [vmem:[%s240 + $0x98] sm:$0xff]
        %v453 = vld [vmem:[%s240 + $0xa0] sm:$0xff]
        %v454 = vld [vmem:[%s240 + $0xa8] sm:$0xff]
        %v455 = vld [vmem:[%s240 + $0xb0] sm:$0xff]
        %v456 = vld [vmem:[%s240 + $0xb8] sm:$0xff]
        %v457 = vld [vmem:[%s240 + $0xc0] sm:$0xff]
        %v458 = vld [vmem:[%s240 + $0xc8] sm:$0xff]
        %v459 = vld [vmem:[%s240 + $0xd0] sm:$0xff]
        %v460 = vld [vmem:[%s240 + $0xd8] sm:$0xff]
        %v461 = vld [vmem:[%s240 + $0xe0] sm:$0xff]
        %v462 = vld [vmem:[%s240 + $0xe8] sm:$0xff]
        %v463 = vld [vmem:[%s240 + $0xf0] sm:$0xff]
        %v464 = vld [vmem:[%s240 + $0xf8] sm:$0xff]
        %v465 = vld [vmem:[%s240 + $0x100] sm:$0xff]
        %v466 = vld [vmem:[%s240 + $0x108] sm:$0xff]
        %v467 = vld [vmem:[%s240 + $0x110] sm:$0xff]
        %v468 = vld [vmem:[%s240 + $0x118] sm:$0xff]
        %v469 = vld [vmem:[%s240 + $0x120] sm:$0xff]
        %v470 = vld [vmem:[%s240 + $0x128] sm:$0xff]
        %v471 = vld [vmem:[%s240 + $0x130] sm:$0xff]
        %v472 = vld [vmem:[%s240 + $0x138] sm:$0xff]
        %v473 = vld [vmem:[%s240 + $0x140] sm:$0xff]
        %v474 = vld [vmem:[%s240 + $0x148] sm:$0xff]
        %v475 = vld [vmem:[%s240 + $0x150] sm:$0xff]
        %v476 = vld [vmem:[%s240 + $0x158] sm:$0xff]
        %v477 = vld [vmem:[%s240 + $0x160] sm:$0xff]
        %v478 = vld [vmem:[%s240 + $0x168] sm:$0xff]
        %v479 = vld [vmem:[%s240 + $0x170] sm:$0xff]
        %v480 = vld [vmem:[%s240 + $0x178] sm:$0xff]
        %v481 = vld [vmem:[%s240 + $0x180] sm:$0xff]
        %v482 = vld [vmem:[%s240 + $0x188] sm:$0xff]
        %v483 = vld [vmem:[%s240 + $0x190] sm:$0xff]
        %v484 = vld [vmem:[%s240 + $0x198] sm:$0xff]
        %v485 = vld [vmem:[%s240 + $0x1a0] sm:$0xff]
        %v486 = vld [vmem:[%s240 + $0x1a8] sm:$0xff]
        %v487 = vld [vmem:[%s240 + $0x1b0] sm:$0xff]
        %v488 = vld [vmem:[%s240 + $0x1b8] sm:$0xff]
        %v489 = vld [vmem:[%s240 + $0x1c0] sm:$0xff]
        %v490 = vld [vmem:[%s240 + $0x1c8] sm:$0xff]
        %v491 = vld [vmem:[%s240 + $0x1d0] sm:$0xff]
        %v492 = vld [vmem:[%s240 + $0x1d8] sm:$0xff]
        %v493 = vld [vmem:[%s240 + $0x1e0] sm:$0xff]
        %v494 = vld [vmem:[%s240 + $0x1e8] sm:$0xff]
        %v495 = vld [vmem:[%s240 + $0x1f0] sm:$0xff]
        %v496 = vld [vmem:[%s240 + $0x1f8] sm:$0xff]
        %v497 = vld [vmem:[%s240 + $0x200] sm:$0xff]
        %v498 = vld [vmem:[%s240 + $0x208] sm:$0xff]
        %v499 = vld [vmem:[%s240 + $0x210] sm:$0xff]
        %v500 = vld [vmem:[%s240 + $0x218] sm:$0xff]
        %v501 = vld [vmem:[%s240 + $0x220] sm:$0xff]
        %v502 = vld [vmem:[%s240 + $0x228] sm:$0xff]
        %v503 = vld [vmem:[%s240 + $0x230] sm:$0xff]
        %v504 = vld [vmem:[%s240 + $0x238] sm:$0xff]
        %v505 = vld [vmem:[%s240 + $0x240] sm:$0xff]
        %v506 = vld [vmem:[%s240 + $0x248] sm:$0xff]
        %v507 = vld [vmem:[%s240 + $0x250] sm:$0xff]
        %v508 = vld [vmem:[%s240 + $0x258] sm:$0xff]
        %v509 = vld [vmem:[%s240 + $0x260] sm:$0xff]
        %v510 = vld [vmem:[%s240 + $0x268] sm:$0xff]
        %v511 = vld [vmem:[%s240 + $0x270] sm:$0xff]
        %v512 = vld [vmem:[%s240 + $0x278] sm:$0xff]
        %v513 = vld [vmem:[%s240 + $0x280] sm:$0xff]
        %v514 = vld [vmem:[%s240 + $0x288] sm:$0xff]
        %v515 = vld [vmem:[%s240 + $0x290] sm:$0xff]
        %v516 = vld [vmem:[%s240 + $0x298] sm:$0xff]
        %v517 = vld [vmem:[%s240 + $0x2a0] sm:$0xff]
        %v518 = vld [vmem:[%s240 + $0x2a8] sm:$0xff]
        %v519 = vld [vmem:[%s240 + $0x2b0] sm:$0xff]
        %v520 = vld [vmem:[%s240 + $0x2b8] sm:$0xff]
        %v521 = vld [vmem:[%s240 + $0x2c0] sm:$0xff]
        %v522 = vld [vmem:[%s240 + $0x2c8] sm:$0xff]
        %v523 = vld [vmem:[%s240 + $0x2d0] sm:$0xff]
        %v524 = vld [vmem:[%s240 + $0x2d8] sm:$0xff]
        %v525 = vld [vmem:[%s240 + $0x2e0] sm:$0xff]
        %v526 = vld [vmem:[%s240 + $0x2e8] sm:$0xff]
        %v527 = vld [vmem:[%s240 + $0x2f0] sm:$0xff]
        %v528 = vld [vmem:[%s240 + $0x2f8] sm:$0xff]
        %v529 = vld [vmem:[%s240 + $0x300] sm:$0xff]
        %v530 = vld [vmem:[%s240 + $0x308] sm:$0xff]
        %v531 = vld [vmem:[%s240 + $0x310] sm:$0xff]
        %v532 = vld [vmem:[%s240 + $0x318] sm:$0xff]
        %v533 = vld [vmem:[%s240 + $0x320] sm:$0xff]
        %v534 = vld [vmem:[%s240 + $0x328] sm:$0xff]
        %v535 = vld [vmem:[%s240 + $0x330] sm:$0xff]
        %v536 = vld [vmem:[%s240 + $0x338] sm:$0xff]
        %v537 = vld [vmem:[%s240 + $0x340] sm:$0xff]
        %v538 = vld [vmem:[%s240 + $0x348] sm:$0xff]
        %v539 = vld [vmem:[%s240 + $0x350] sm:$0xff]
        %v540 = vld [vmem:[%s240 + $0x358] sm:$0xff]
        %v541 = vld [vmem:[%s240 + $0x360] sm:$0xff]
        %v542 = vld [vmem:[%s240 + $0x368] sm:$0xff]
        %v543 = vld [vmem:[%s240 + $0x370] sm:$0xff]
        %v544 = vld [vmem:[%s240 + $0x378] sm:$0xff]
        %v545 = vld [vmem:[%s240 + $0x380] sm:$0xff]
        %v546 = vld [vmem:[%s240 + $0x388] sm:$0xff]
        %v547 = vld [vmem:[%s240 + $0x390] sm:$0xff]
        %v548 = vld [vmem:[%s240 + $0x398] sm:$0xff]
        %v549 = vld [vmem:[%s240 + $0x3a0] sm:$0xff]
        %v550 = vld [vmem:[%s240 + $0x3a8] sm:$0xff]
        %v551 = vld [vmem:[%s240 + $0x3b0] sm:$0xff]
        %v552 = vld [vmem:[%s240 + $0x3b8] sm:$0xff]
        %v553 = vld [vmem:[%s240 + $0x3c0] sm:$0xff]
        %v554 = vld [vmem:[%s240 + $0x3c8] sm:$0xff]
        %v555 = vld [vmem:[%s240 + $0x3d0] sm:$0xff]
        %v556 = vld [vmem:[%s240 + $0x3d8] sm:$0xff]
        %v557 = vld [vmem:[%s240 + $0x3e0] sm:$0xff]
        %v558 = vld [vmem:[%s240 + $0x3e8] sm:$0xff]
        %v559 = vld [vmem:[%s240 + $0x3f0] sm:$0xff]
        %v560 = vld [vmem:[%s240 + $0x3f8] sm:$0xff]
        %v561 = vld [vmem:[%s240 + $0x400] sm:$0xff]
        %v562 = vld [vmem:[%s240 + $0x408] sm:$0xff]
        %v563 = vld [vmem:[%s240 + $0x410] sm:$0xff]
        %v564 = vld [vmem:[%s240 + $0x418] sm:$0xff]
        %v565 = vld [vmem:[%s240 + $0x420] sm:$0xff]
        %v566 = vld [vmem:[%s240 + $0x428] sm:$0xff]
        %v567 = vld [vmem:[%s240 + $0x430] sm:$0xff]
        %v568 = vld [vmem:[%s240 + $0x438] sm:$0xff]
        %v569 = vld [vmem:[%s240 + $0x440] sm:$0xff]
        %v570 = vld [vmem:[%s240 + $0x448] sm:$0xff]
        %v571 = vld [vmem:[%s240 + $0x450] sm:$0xff]
        %v572 = vld [vmem:[%s240 + $0x458] sm:$0xff]
        %v573 = vld [vmem:[%s240 + $0x460] sm:$0xff]
        %v574 = vld [vmem:[%s240 + $0x468] sm:$0xff]
        %v575 = vld [vmem:[%s240 + $0x470] sm:$0xff]
        %v576 = vld [vmem:[%s240 + $0x478] sm:$0xff]
        %v577 = vpack.c.bf16 %v436, %v433
        %v578 = vpack.c.bf16 %v437, %v434
        %v579 = vpack.c.bf16 %v438, %v435
        %v580 = vpack.c.bf16 %v442, %v439
        %v581 = vpack.c.bf16 %v443, %v440
        %v582 = vpack.c.bf16 %v444, %v441
        %v583 = vpack.c.bf16 %v448, %v445
        %v584 = vpack.c.bf16 %v449, %v446
        %v585 = vpack.c.bf16 %v450, %v447
        %v586 = vpack.c.bf16 %v454, %v451
        %v587 = vpack.c.bf16 %v455, %v452
        %v588 = vpack.c.bf16 %v456, %v453
        %v589 = vpack.c.bf16 %v460, %v457
        %v590 = vpack.c.bf16 %v461, %v458
        %v591 = vpack.c.bf16 %v462, %v459
        %v592 = vpack.c.bf16 %v466, %v463
        %v593 = vpack.c.bf16 %v467, %v464
        %v594 = vpack.c.bf16 %v468, %v465
        %v595 = vpack.c.bf16 %v472, %v469
        %v596 = vpack.c.bf16 %v473, %v470
        %v597 = vpack.c.bf16 %v474, %v471
        %v598 = vpack.c.bf16 %v478, %v475
        %v599 = vpack.c.bf16 %v479, %v476
        %v600 = vpack.c.bf16 %v480, %v477
        %v601 = vpack.c.bf16 %v484, %v481
        %v602 = vpack.c.bf16 %v485, %v482
        %v603 = vpack.c.bf16 %v486, %v483
        %v604 = vpack.c.bf16 %v490, %v487
        %v605 = vpack.c.bf16 %v491, %v488
        %v606 = vpack.c.bf16 %v492, %v489
        %v607 = vpack.c.bf16 %v496, %v493
        %v608 = vpack.c.bf16 %v497, %v494
        %v609 = vpack.c.bf16 %v498, %v495
        %v610 = vpack.c.bf16 %v502, %v499
        %v611 = vpack.c.bf16 %v503, %v500
        %v612 = vpack.c.bf16 %v504, %v501
        %v613 = vpack.c.bf16 %v508, %v505
        %v614 = vpack.c.bf16 %v509, %v506
        %v615 = vpack.c.bf16 %v510, %v507
        %v616 = vpack.c.bf16 %v514, %v511
        %v617 = vpack.c.bf16 %v515, %v512
        %v618 = vpack.c.bf16 %v516, %v513
        %v619 = vpack.c.bf16 %v520, %v517
        %v620 = vpack.c.bf16 %v521, %v518
        %v621 = vpack.c.bf16 %v522, %v519
        %v622 = vpack.c.bf16 %v526, %v523
        %v623 = vpack.c.bf16 %v527, %v524
        %v624 = vpack.c.bf16 %v528, %v525
        %v625 = vpack.c.bf16 %v532, %v529
        %v626 = vpack.c.bf16 %v533, %v530
        %v627 = vpack.c.bf16 %v534, %v531
        %v628 = vpack.c.bf16 %v538, %v535
        %v629 = vpack.c.bf16 %v539, %v536
        %v630 = vpack.c.bf16 %v540, %v537
        %v631 = vpack.c.bf16 %v544, %v541
        %v632 = vpack.c.bf16 %v545, %v542
        %v633 = vpack.c.bf16 %v546, %v543
        %v634 = vpack.c.bf16 %v550, %v547
        %v635 = vpack.c.bf16 %v551, %v548
        %v636 = vpack.c.bf16 %v552, %v549
        %v637 = vpack.c.bf16 %v556, %v553
        %v638 = vpack.c.bf16 %v557, %v554
        %v639 = vpack.c.bf16 %v558, %v555
        %v640 = vpack.c.bf16 %v562, %v559
        %v641 = vpack.c.bf16 %v563, %v560
        %v642 = vpack.c.bf16 %v564, %v561
        %v643 = vpack.c.bf16 %v568, %v565
        %v644 = vpack.c.bf16 %v569, %v566
        %v645 = vpack.c.bf16 %v570, %v567
        %v646 = vpack.c.bf16 %v574, %v571
        %v647 = vpack.c.bf16 %v575, %v572
        %v648 = vpack.c.bf16 %v576, %v573
        %v649 = vld [vmem:[%s250] sm:$0x7]
        %v651 = vperm.slane %v649, 0
        %v652 = vperm.slane %v649, 1
        %v653 = vperm.slane %v649, 2
        %657 = vmatpush.bf16.msra.mxu0 %v598
        %658 = vmatpush.bf16.msra.mxu0 %v595
        %659 = vmatpush.bf16.msra.mxu0 %v592
        %660 = vmatpush.bf16.msra.mxu0 %v589
        %661 = vmatpush.bf16.msra.mxu0 %v586
        %662 = vmatpush.bf16.msra.mxu0 %v583
        %663 = vmatpush.bf16.msra.mxu0 %v580
        %664 = vmatpush.bf16.msra.mxu0 %v577
        %665 = vmatmul.bf16.gmra.mxu0 %v385
        %v666 = vpop.f32.mrf.mxu0
        %v667 = vadd.f32 %v651, %v666
        %v668 = vpop.f32.mrf.mxu0
        %v669 = vadd.f32 %v651, %v668
        %670 = vmatmul.bf16.gmra.mxu0 %v388
        %v671 = vpop.f32.mrf.mxu0
        %v672 = vadd.f32 %v651, %v671
        %v673 = vpop.f32.mrf.mxu0
        %v674 = vadd.f32 %v651, %v673
        %675 = vmatmul.bf16.gmra.mxu0 %v391
        %v676 = vpop.f32.mrf.mxu0
        %v677 = vadd.f32 %v651, %v676
        %v678 = vpop.f32.mrf.mxu0
        %v679 = vadd.f32 %v651, %v678
        %680 = vmatmul.bf16.gmra.mxu0 %v394
        %v681 = vpop.f32.mrf.mxu0
        %v682 = vadd.f32 %v651, %v681
        %v683 = vpop.f32.mrf.mxu0
        %v684 = vadd.f32 %v651, %v683
        %685 = vmatmul.bf16.gmra.mxu0 %v397
        %v686 = vpop.f32.mrf.mxu0
        %v687 = vadd.f32 %v651, %v686
        %v688 = vpop.f32.mrf.mxu0
        %v689 = vadd.f32 %v651, %v688
        %690 = vmatmul.bf16.gmra.mxu0 %v400
        %v691 = vpop.f32.mrf.mxu0
        %v692 = vadd.f32 %v651, %v691
        %v693 = vpop.f32.mrf.mxu0
        %v694 = vadd.f32 %v651, %v693
        %695 = vmatmul.bf16.gmra.mxu0 %v403
        %v696 = vpop.f32.mrf.mxu0
        %v697 = vadd.f32 %v651, %v696
        %v698 = vpop.f32.mrf.mxu0
        %v699 = vadd.f32 %v651, %v698
        %700 = vmatmul.bf16.gmra.mxu0 %v406
        %v701 = vpop.f32.mrf.mxu0
        %v702 = vadd.f32 %v651, %v701
        %v703 = vpop.f32.mrf.mxu0
        %v704 = vadd.f32 %v651, %v703
        %705 = vmatmul.bf16.gmra.mxu0 %v409
        %v706 = vpop.f32.mrf.mxu0
        %v707 = vadd.f32 %v651, %v706
        %v708 = vpop.f32.mrf.mxu0
        %v709 = vadd.f32 %v651, %v708
        %710 = vmatmul.bf16.gmra.mxu0 %v412
        %v711 = vpop.f32.mrf.mxu0
        %v712 = vadd.f32 %v651, %v711
        %v713 = vpop.f32.mrf.mxu0
        %v714 = vadd.f32 %v651, %v713
        %715 = vmatmul.bf16.gmra.mxu0 %v415
        %v716 = vpop.f32.mrf.mxu0
        %v717 = vadd.f32 %v651, %v716
        %v718 = vpop.f32.mrf.mxu0
        %v719 = vadd.f32 %v651, %v718
        %720 = vmatmul.bf16.gmra.mxu0 %v418
        %v721 = vpop.f32.mrf.mxu0
        %v722 = vadd.f32 %v651, %v721
        %v723 = vpop.f32.mrf.mxu0
        %v724 = vadd.f32 %v651, %v723
        %725 = vmatmul.bf16.gmra.mxu0 %v421
        %v726 = vpop.f32.mrf.mxu0
        %v727 = vadd.f32 %v651, %v726
        %v728 = vpop.f32.mrf.mxu0
        %v729 = vadd.f32 %v651, %v728
        %730 = vmatmul.bf16.gmra.mxu0 %v424
        %v731 = vpop.f32.mrf.mxu0
        %v732 = vadd.f32 %v651, %v731
        %v733 = vpop.f32.mrf.mxu0
        %v734 = vadd.f32 %v651, %v733
        %735 = vmatmul.bf16.gmra.mxu0 %v427
        %v736 = vpop.f32.mrf.mxu0
        %v737 = vadd.f32 %v651, %v736
        %v738 = vpop.f32.mrf.mxu0
        %v739 = vadd.f32 %v651, %v738
        %740 = vmatmul.bf16.gmra.mxu0 %v430
        %v741 = vpop.f32.mrf.mxu0
        %v742 = vadd.f32 %v651, %v741
        %v743 = vpop.f32.mrf.mxu0
        %v744 = vadd.f32 %v651, %v743
        %745 = vdwg.mxu0
        %746 = vmatpush.bf16.msra.mxu0 %v622
        %747 = vmatpush.bf16.msra.mxu0 %v619
        %748 = vmatpush.bf16.msra.mxu0 %v616
        %749 = vmatpush.bf16.msra.mxu0 %v613
        %750 = vmatpush.bf16.msra.mxu0 %v610
        %751 = vmatpush.bf16.msra.mxu0 %v607
        %752 = vmatpush.bf16.msra.mxu0 %v604
        %753 = vmatpush.bf16.msra.mxu0 %v601
        %754 = vmatmul.bf16.gmra.mxu0 %v386
        %v755 = vpop.f32.mrf.mxu0
        %v756 = vadd.f32 %v667, %v755
        %v757 = vpop.f32.mrf.mxu0
        %v758 = vadd.f32 %v669, %v757
        %759 = vmatmul.bf16.gmra.mxu0 %v389
        %v760 = vpop.f32.mrf.mxu0
        %v761 = vadd.f32 %v672, %v760
        %v762 = vpop.f32.mrf.mxu0
        %v763 = vadd.f32 %v674, %v762
        %764 = vmatmul.bf16.gmra.mxu0 %v392
        %v765 = vpop.f32.mrf.mxu0
        %v766 = vadd.f32 %v677, %v765
        %v767 = vpop.f32.mrf.mxu0
        %v768 = vadd.f32 %v679, %v767
        %769 = vmatmul.bf16.gmra.mxu0 %v395
        %v770 = vpop.f32.mrf.mxu0
        %v771 = vadd.f32 %v682, %v770
        %v772 = vpop.f32.mrf.mxu0
        %v773 = vadd.f32 %v684, %v772
        %774 = vmatmul.bf16.gmra.mxu0 %v398
        %v775 = vpop.f32.mrf.mxu0
        %v776 = vadd.f32 %v687, %v775
        %v777 = vpop.f32.mrf.mxu0
        %v778 = vadd.f32 %v689, %v777
        %779 = vmatmul.bf16.gmra.mxu0 %v401
        %v780 = vpop.f32.mrf.mxu0
        %v781 = vadd.f32 %v692, %v780
        %v782 = vpop.f32.mrf.mxu0
        %v783 = vadd.f32 %v694, %v782
        %784 = vmatmul.bf16.gmra.mxu0 %v404
        %v785 = vpop.f32.mrf.mxu0
        %v786 = vadd.f32 %v697, %v785
        %v787 = vpop.f32.mrf.mxu0
        %v788 = vadd.f32 %v699, %v787
        %789 = vmatmul.bf16.gmra.mxu0 %v407
        %v790 = vpop.f32.mrf.mxu0
        %v791 = vadd.f32 %v702, %v790
        %v792 = vpop.f32.mrf.mxu0
        %v793 = vadd.f32 %v704, %v792
        %794 = vmatmul.bf16.gmra.mxu0 %v410
        %v795 = vpop.f32.mrf.mxu0
        %v796 = vadd.f32 %v707, %v795
        %v797 = vpop.f32.mrf.mxu0
        %v798 = vadd.f32 %v709, %v797
        %799 = vmatmul.bf16.gmra.mxu0 %v413
        %v800 = vpop.f32.mrf.mxu0
        %v801 = vadd.f32 %v712, %v800
        %v802 = vpop.f32.mrf.mxu0
        %v803 = vadd.f32 %v714, %v802
        %804 = vmatmul.bf16.gmra.mxu0 %v416
        %v805 = vpop.f32.mrf.mxu0
        %v806 = vadd.f32 %v717, %v805
        %v807 = vpop.f32.mrf.mxu0
        %v808 = vadd.f32 %v719, %v807
        %809 = vmatmul.bf16.gmra.mxu0 %v419
        %v810 = vpop.f32.mrf.mxu0
        %v811 = vadd.f32 %v722, %v810
        %v812 = vpop.f32.mrf.mxu0
        %v813 = vadd.f32 %v724, %v812
        %814 = vmatmul.bf16.gmra.mxu0 %v422
        %v815 = vpop.f32.mrf.mxu0
        %v816 = vadd.f32 %v727, %v815
        %v817 = vpop.f32.mrf.mxu0
        %v818 = vadd.f32 %v729, %v817
        %819 = vmatmul.bf16.gmra.mxu0 %v425
        %v820 = vpop.f32.mrf.mxu0
        %v821 = vadd.f32 %v732, %v820
        %v822 = vpop.f32.mrf.mxu0
        %v823 = vadd.f32 %v734, %v822
        %824 = vmatmul.bf16.gmra.mxu0 %v428
        %v825 = vpop.f32.mrf.mxu0
        %v826 = vadd.f32 %v737, %v825
        %v827 = vpop.f32.mrf.mxu0
        %v828 = vadd.f32 %v739, %v827
        %829 = vmatmul.bf16.gmra.mxu0 %v431
        %v830 = vpop.f32.mrf.mxu0
        %v831 = vadd.f32 %v742, %v830
        %v832 = vpop.f32.mrf.mxu0
        %v833 = vadd.f32 %v744, %v832
        %834 = vdwg.mxu0
        %835 = vmatpush.bf16.msra.mxu0 %v646
        %836 = vmatpush.bf16.msra.mxu0 %v643
        %837 = vmatpush.bf16.msra.mxu0 %v640
        %838 = vmatpush.bf16.msra.mxu0 %v637
        %839 = vmatpush.bf16.msra.mxu0 %v634
        %840 = vmatpush.bf16.msra.mxu0 %v631
        %841 = vmatpush.bf16.msra.mxu0 %v628
        %842 = vmatpush.bf16.msra.mxu0 %v625
        %843 = vmatmul.bf16.gmra.mxu0 %v387
        %v844 = vpop.f32.mrf.mxu0
        %v845 = vadd.f32 %v756, %v844
        %v846 = vpop.f32.mrf.mxu0
        %v847 = vadd.f32 %v758, %v846
        %848 = vmatmul.bf16.gmra.mxu0 %v390
        %v849 = vpop.f32.mrf.mxu0
        %v850 = vadd.f32 %v761, %v849
        %v851 = vpop.f32.mrf.mxu0
        %v852 = vadd.f32 %v763, %v851
        %853 = vmatmul.bf16.gmra.mxu0 %v393
        %v854 = vpop.f32.mrf.mxu0
        %v855 = vadd.f32 %v766, %v854
        %v856 = vpop.f32.mrf.mxu0
        %v857 = vadd.f32 %v768, %v856
        %858 = vmatmul.bf16.gmra.mxu0 %v396
        %v859 = vpop.f32.mrf.mxu0
        %v860 = vadd.f32 %v771, %v859
        %v861 = vpop.f32.mrf.mxu0
        %v862 = vadd.f32 %v773, %v861
        %863 = vmatmul.bf16.gmra.mxu0 %v399
        %v864 = vpop.f32.mrf.mxu0
        %v865 = vadd.f32 %v776, %v864
        %v866 = vpop.f32.mrf.mxu0
        %v867 = vadd.f32 %v778, %v866
        %868 = vmatmul.bf16.gmra.mxu0 %v402
        %v869 = vpop.f32.mrf.mxu0
        %v870 = vadd.f32 %v781, %v869
        %v871 = vpop.f32.mrf.mxu0
        %v872 = vadd.f32 %v783, %v871
        %873 = vmatmul.bf16.gmra.mxu0 %v405
        %v874 = vpop.f32.mrf.mxu0
        %v875 = vadd.f32 %v786, %v874
        %v876 = vpop.f32.mrf.mxu0
        %v877 = vadd.f32 %v788, %v876
        %878 = vmatmul.bf16.gmra.mxu0 %v408
        %v879 = vpop.f32.mrf.mxu0
        %v880 = vadd.f32 %v791, %v879
        %v881 = vpop.f32.mrf.mxu0
        %v882 = vadd.f32 %v793, %v881
        %883 = vmatmul.bf16.gmra.mxu0 %v411
        %v884 = vpop.f32.mrf.mxu0
        %v885 = vadd.f32 %v796, %v884
        %v886 = vpop.f32.mrf.mxu0
        %v887 = vadd.f32 %v798, %v886
        %888 = vmatmul.bf16.gmra.mxu0 %v414
        %v889 = vpop.f32.mrf.mxu0
        %v890 = vadd.f32 %v801, %v889
        %v891 = vpop.f32.mrf.mxu0
        %v892 = vadd.f32 %v803, %v891
        %893 = vmatmul.bf16.gmra.mxu0 %v417
        %v894 = vpop.f32.mrf.mxu0
        %v895 = vadd.f32 %v806, %v894
        %v896 = vpop.f32.mrf.mxu0
        %v897 = vadd.f32 %v808, %v896
        %898 = vmatmul.bf16.gmra.mxu0 %v420
        %v899 = vpop.f32.mrf.mxu0
        %v900 = vadd.f32 %v811, %v899
        %v901 = vpop.f32.mrf.mxu0
        %v902 = vadd.f32 %v813, %v901
        %903 = vmatmul.bf16.gmra.mxu0 %v423
        %v904 = vpop.f32.mrf.mxu0
        %v905 = vadd.f32 %v816, %v904
        %v906 = vpop.f32.mrf.mxu0
        %v907 = vadd.f32 %v818, %v906
        %908 = vmatmul.bf16.gmra.mxu0 %v426
        %v909 = vpop.f32.mrf.mxu0
        %v910 = vadd.f32 %v821, %v909
        %v911 = vpop.f32.mrf.mxu0
        %v912 = vadd.f32 %v823, %v911
        %913 = vmatmul.bf16.gmra.mxu0 %v429
        %v914 = vpop.f32.mrf.mxu0
        %v915 = vadd.f32 %v826, %v914
        %v916 = vpop.f32.mrf.mxu0
        %v917 = vadd.f32 %v828, %v916
        %918 = vmatmul.bf16.gmra.mxu0 %v432
        %v919 = vpop.f32.mrf.mxu0
        %v920 = vadd.f32 %v831, %v919
        %v921 = vpop.f32.mrf.mxu0
        %v922 = vadd.f32 %v833, %v921
        %923 = vdwg.mxu0
        %924 = vmatpush.bf16.msra.mxu0 %v599
        %925 = vmatpush.bf16.msra.mxu0 %v596
        %926 = vmatpush.bf16.msra.mxu0 %v593
        %927 = vmatpush.bf16.msra.mxu0 %v590
        %928 = vmatpush.bf16.msra.mxu0 %v587
        %929 = vmatpush.bf16.msra.mxu0 %v584
        %930 = vmatpush.bf16.msra.mxu0 %v581
        %931 = vmatpush.bf16.msra.mxu0 %v578
        %932 = vmatmul.bf16.gmra.mxu0 %v385
        %v933 = vpop.f32.mrf.mxu0
        %v934 = vadd.f32 %v652, %v933
        %v935 = vpop.f32.mrf.mxu0
        %v936 = vadd.f32 %v652, %v935
        %937 = vmatmul.bf16.gmra.mxu0 %v388
        %v938 = vpop.f32.mrf.mxu0
        %v939 = vadd.f32 %v652, %v938
        %v940 = vpop.f32.mrf.mxu0
        %v941 = vadd.f32 %v652, %v940
        %942 = vmatmul.bf16.gmra.mxu0 %v391
        %v943 = vpop.f32.mrf.mxu0
        %v944 = vadd.f32 %v652, %v943
        %v945 = vpop.f32.mrf.mxu0
        %v946 = vadd.f32 %v652, %v945
        %947 = vmatmul.bf16.gmra.mxu0 %v394
        %v948 = vpop.f32.mrf.mxu0
        %v949 = vadd.f32 %v652, %v948
        %v950 = vpop.f32.mrf.mxu0
        %v951 = vadd.f32 %v652, %v950
        %952 = vmatmul.bf16.gmra.mxu0 %v397
        %v953 = vpop.f32.mrf.mxu0
        %v954 = vadd.f32 %v652, %v953
        %v955 = vpop.f32.mrf.mxu0
        %v956 = vadd.f32 %v652, %v955
        %957 = vmatmul.bf16.gmra.mxu0 %v400
        %v958 = vpop.f32.mrf.mxu0
        %v959 = vadd.f32 %v652, %v958
        %v960 = vpop.f32.mrf.mxu0
        %v961 = vadd.f32 %v652, %v960
        %962 = vmatmul.bf16.gmra.mxu0 %v403
        %v963 = vpop.f32.mrf.mxu0
        %v964 = vadd.f32 %v652, %v963
        %v965 = vpop.f32.mrf.mxu0
        %v966 = vadd.f32 %v652, %v965
        %967 = vmatmul.bf16.gmra.mxu0 %v406
        %v968 = vpop.f32.mrf.mxu0
        %v969 = vadd.f32 %v652, %v968
        %v970 = vpop.f32.mrf.mxu0
        %v971 = vadd.f32 %v652, %v970
        %972 = vmatmul.bf16.gmra.mxu0 %v409
        %v973 = vpop.f32.mrf.mxu0
        %v974 = vadd.f32 %v652, %v973
        %v975 = vpop.f32.mrf.mxu0
        %v976 = vadd.f32 %v652, %v975
        %977 = vmatmul.bf16.gmra.mxu0 %v412
        %v978 = vpop.f32.mrf.mxu0
        %v979 = vadd.f32 %v652, %v978
        %v980 = vpop.f32.mrf.mxu0
        %v981 = vadd.f32 %v652, %v980
        %982 = vmatmul.bf16.gmra.mxu0 %v415
        %v983 = vpop.f32.mrf.mxu0
        %v984 = vadd.f32 %v652, %v983
        %v985 = vpop.f32.mrf.mxu0
        %v986 = vadd.f32 %v652, %v985
        %987 = vmatmul.bf16.gmra.mxu0 %v418
        %v988 = vpop.f32.mrf.mxu0
        %v989 = vadd.f32 %v652, %v988
        %v990 = vpop.f32.mrf.mxu0
        %v991 = vadd.f32 %v652, %v990
        %992 = vmatmul.bf16.gmra.mxu0 %v421
        %v993 = vpop.f32.mrf.mxu0
        %v994 = vadd.f32 %v652, %v993
        %v995 = vpop.f32.mrf.mxu0
        %v996 = vadd.f32 %v652, %v995
        %997 = vmatmul.bf16.gmra.mxu0 %v424
        %v998 = vpop.f32.mrf.mxu0
        %v999 = vadd.f32 %v652, %v998
        %v1000 = vpop.f32.mrf.mxu0
        %v1001 = vadd.f32 %v652, %v1000
        %1002 = vmatmul.bf16.gmra.mxu0 %v427
        %v1003 = vpop.f32.mrf.mxu0
        %v1004 = vadd.f32 %v652, %v1003
        %v1005 = vpop.f32.mrf.mxu0
        %v1006 = vadd.f32 %v652, %v1005
        %1007 = vmatmul.bf16.gmra.mxu0 %v430
        %v1008 = vpop.f32.mrf.mxu0
        %v1009 = vadd.f32 %v652, %v1008
        %v1010 = vpop.f32.mrf.mxu0
        %v1011 = vadd.f32 %v652, %v1010
        %1012 = vdwg.mxu0
        %1013 = vmatpush.bf16.msra.mxu0 %v623
        %1014 = vmatpush.bf16.msra.mxu0 %v620
        %1015 = vmatpush.bf16.msra.mxu0 %v617
        %1016 = vmatpush.bf16.msra.mxu0 %v614
        %1017 = vmatpush.bf16.msra.mxu0 %v611
        %1018 = vmatpush.bf16.msra.mxu0 %v608
        %1019 = vmatpush.bf16.msra.mxu0 %v605
        %1020 = vmatpush.bf16.msra.mxu0 %v602
        %1021 = vmatmul.bf16.gmra.mxu0 %v386
        %v1022 = vpop.f32.mrf.mxu0
        %v1023 = vadd.f32 %v934, %v1022
        %v1024 = vpop.f32.mrf.mxu0
        %v1025 = vadd.f32 %v936, %v1024
        %1026 = vmatmul.bf16.gmra.mxu0 %v389
        %v1027 = vpop.f32.mrf.mxu0
        %v1028 = vadd.f32 %v939, %v1027
        %v1029 = vpop.f32.mrf.mxu0
        %v1030 = vadd.f32 %v941, %v1029
        %1031 = vmatmul.bf16.gmra.mxu0 %v392
        %v1032 = vpop.f32.mrf.mxu0
        %v1033 = vadd.f32 %v944, %v1032
        %v1034 = vpop.f32.mrf.mxu0
        %v1035 = vadd.f32 %v946, %v1034
        %1036 = vmatmul.bf16.gmra.mxu0 %v395
        %v1037 = vpop.f32.mrf.mxu0
        %v1038 = vadd.f32 %v949, %v1037
        %v1039 = vpop.f32.mrf.mxu0
        %v1040 = vadd.f32 %v951, %v1039
        %1041 = vmatmul.bf16.gmra.mxu0 %v398
        %v1042 = vpop.f32.mrf.mxu0
        %v1043 = vadd.f32 %v954, %v1042
        %v1044 = vpop.f32.mrf.mxu0
        %v1045 = vadd.f32 %v956, %v1044
        %1046 = vmatmul.bf16.gmra.mxu0 %v401
        %v1047 = vpop.f32.mrf.mxu0
        %v1048 = vadd.f32 %v959, %v1047
        %v1049 = vpop.f32.mrf.mxu0
        %v1050 = vadd.f32 %v961, %v1049
        %1051 = vmatmul.bf16.gmra.mxu0 %v404
        %v1052 = vpop.f32.mrf.mxu0
        %v1053 = vadd.f32 %v964, %v1052
        %v1054 = vpop.f32.mrf.mxu0
        %v1055 = vadd.f32 %v966, %v1054
        %1056 = vmatmul.bf16.gmra.mxu0 %v407
        %v1057 = vpop.f32.mrf.mxu0
        %v1058 = vadd.f32 %v969, %v1057
        %v1059 = vpop.f32.mrf.mxu0
        %v1060 = vadd.f32 %v971, %v1059
        %1061 = vmatmul.bf16.gmra.mxu0 %v410
        %v1062 = vpop.f32.mrf.mxu0
        %v1063 = vadd.f32 %v974, %v1062
        %v1064 = vpop.f32.mrf.mxu0
        %v1065 = vadd.f32 %v976, %v1064
        %1066 = vmatmul.bf16.gmra.mxu0 %v413
        %v1067 = vpop.f32.mrf.mxu0
        %v1068 = vadd.f32 %v979, %v1067
        %v1069 = vpop.f32.mrf.mxu0
        %v1070 = vadd.f32 %v981, %v1069
        %1071 = vmatmul.bf16.gmra.mxu0 %v416
        %v1072 = vpop.f32.mrf.mxu0
        %v1073 = vadd.f32 %v984, %v1072
        %v1074 = vpop.f32.mrf.mxu0
        %v1075 = vadd.f32 %v986, %v1074
        %1076 = vmatmul.bf16.gmra.mxu0 %v419
        %v1077 = vpop.f32.mrf.mxu0
        %v1078 = vadd.f32 %v989, %v1077
        %v1079 = vpop.f32.mrf.mxu0
        %v1080 = vadd.f32 %v991, %v1079
        %1081 = vmatmul.bf16.gmra.mxu0 %v422
        %v1082 = vpop.f32.mrf.mxu0
        %v1083 = vadd.f32 %v994, %v1082
        %v1084 = vpop.f32.mrf.mxu0
        %v1085 = vadd.f32 %v996, %v1084
        %1086 = vmatmul.bf16.gmra.mxu0 %v425
        %v1087 = vpop.f32.mrf.mxu0
        %v1088 = vadd.f32 %v999, %v1087
        %v1089 = vpop.f32.mrf.mxu0
        %v1090 = vadd.f32 %v1001, %v1089
        %1091 = vmatmul.bf16.gmra.mxu0 %v428
        %v1092 = vpop.f32.mrf.mxu0
        %v1093 = vadd.f32 %v1004, %v1092
        %v1094 = vpop.f32.mrf.mxu0
        %v1095 = vadd.f32 %v1006, %v1094
        %1096 = vmatmul.bf16.gmra.mxu0 %v431
        %v1097 = vpop.f32.mrf.mxu0
        %v1098 = vadd.f32 %v1009, %v1097
        %v1099 = vpop.f32.mrf.mxu0
        %v1100 = vadd.f32 %v1011, %v1099
        %1101 = vdwg.mxu0
        %1102 = vmatpush.bf16.msra.mxu0 %v647
        %1103 = vmatpush.bf16.msra.mxu0 %v644
        %1104 = vmatpush.bf16.msra.mxu0 %v641
        %1105 = vmatpush.bf16.msra.mxu0 %v638
        %1106 = vmatpush.bf16.msra.mxu0 %v635
        %1107 = vmatpush.bf16.msra.mxu0 %v632
        %1108 = vmatpush.bf16.msra.mxu0 %v629
        %1109 = vmatpush.bf16.msra.mxu0 %v626
        %1110 = vmatmul.bf16.gmra.mxu0 %v387
        %v1111 = vpop.f32.mrf.mxu0
        %v1112 = vadd.f32 %v1023, %v1111
        %v1113 = vpop.f32.mrf.mxu0
        %v1114 = vadd.f32 %v1025, %v1113
        %1115 = vmatmul.bf16.gmra.mxu0 %v390
        %v1116 = vpop.f32.mrf.mxu0
        %v1117 = vadd.f32 %v1028, %v1116
        %v1118 = vpop.f32.mrf.mxu0
        %v1119 = vadd.f32 %v1030, %v1118
        %1120 = vmatmul.bf16.gmra.mxu0 %v393
        %v1121 = vpop.f32.mrf.mxu0
        %v1122 = vadd.f32 %v1033, %v1121
        %v1123 = vpop.f32.mrf.mxu0
        %v1124 = vadd.f32 %v1035, %v1123
        %1125 = vmatmul.bf16.gmra.mxu0 %v396
        %v1126 = vpop.f32.mrf.mxu0
        %v1127 = vadd.f32 %v1038, %v1126
        %v1128 = vpop.f32.mrf.mxu0
        %v1129 = vadd.f32 %v1040, %v1128
        %1130 = vmatmul.bf16.gmra.mxu0 %v399
        %v1131 = vpop.f32.mrf.mxu0
        %v1132 = vadd.f32 %v1043, %v1131
        %v1133 = vpop.f32.mrf.mxu0
        %v1134 = vadd.f32 %v1045, %v1133
        %1135 = vmatmul.bf16.gmra.mxu0 %v402
        %v1136 = vpop.f32.mrf.mxu0
        %v1137 = vadd.f32 %v1048, %v1136
        %v1138 = vpop.f32.mrf.mxu0
        %v1139 = vadd.f32 %v1050, %v1138
        %1140 = vmatmul.bf16.gmra.mxu0 %v405
        %v1141 = vpop.f32.mrf.mxu0
        %v1142 = vadd.f32 %v1053, %v1141
        %v1143 = vpop.f32.mrf.mxu0
        %v1144 = vadd.f32 %v1055, %v1143
        %1145 = vmatmul.bf16.gmra.mxu0 %v408
        %v1146 = vpop.f32.mrf.mxu0
        %v1147 = vadd.f32 %v1058, %v1146
        %v1148 = vpop.f32.mrf.mxu0
        %v1149 = vadd.f32 %v1060, %v1148
        %1150 = vmatmul.bf16.gmra.mxu0 %v411
        %v1151 = vpop.f32.mrf.mxu0
        %v1152 = vadd.f32 %v1063, %v1151
        %v1153 = vpop.f32.mrf.mxu0
        %v1154 = vadd.f32 %v1065, %v1153
        %1155 = vmatmul.bf16.gmra.mxu0 %v414
        %v1156 = vpop.f32.mrf.mxu0
        %v1157 = vadd.f32 %v1068, %v1156
        %v1158 = vpop.f32.mrf.mxu0
        %v1159 = vadd.f32 %v1070, %v1158
        %1160 = vmatmul.bf16.gmra.mxu0 %v417
        %v1161 = vpop.f32.mrf.mxu0
        %v1162 = vadd.f32 %v1073, %v1161
        %v1163 = vpop.f32.mrf.mxu0
        %v1164 = vadd.f32 %v1075, %v1163
        %1165 = vmatmul.bf16.gmra.mxu0 %v420
        %v1166 = vpop.f32.mrf.mxu0
        %v1167 = vadd.f32 %v1078, %v1166
        %v1168 = vpop.f32.mrf.mxu0
        %v1169 = vadd.f32 %v1080, %v1168
        %1170 = vmatmul.bf16.gmra.mxu0 %v423
        %v1171 = vpop.f32.mrf.mxu0
        %v1172 = vadd.f32 %v1083, %v1171
        %v1173 = vpop.f32.mrf.mxu0
        %v1174 = vadd.f32 %v1085, %v1173
        %1175 = vmatmul.bf16.gmra.mxu0 %v426
        %v1176 = vpop.f32.mrf.mxu0
        %v1177 = vadd.f32 %v1088, %v1176
        %v1178 = vpop.f32.mrf.mxu0
        %v1179 = vadd.f32 %v1090, %v1178
        %1180 = vmatmul.bf16.gmra.mxu0 %v429
        %v1181 = vpop.f32.mrf.mxu0
        %v1182 = vadd.f32 %v1093, %v1181
        %v1183 = vpop.f32.mrf.mxu0
        %v1184 = vadd.f32 %v1095, %v1183
        %1185 = vmatmul.bf16.gmra.mxu0 %v432
        %v1186 = vpop.f32.mrf.mxu0
        %v1187 = vadd.f32 %v1098, %v1186
        %v1188 = vpop.f32.mrf.mxu0
        %v1189 = vadd.f32 %v1100, %v1188
        %1190 = vdwg.mxu0
        %1191 = vmatpush.bf16.msra.mxu0 %v600
        %1192 = vmatpush.bf16.msra.mxu0 %v597
        %1193 = vmatpush.bf16.msra.mxu0 %v594
        %1194 = vmatpush.bf16.msra.mxu0 %v591
        %1195 = vmatpush.bf16.msra.mxu0 %v588
        %1196 = vmatpush.bf16.msra.mxu0 %v585
        %1197 = vmatpush.bf16.msra.mxu0 %v582
        %1198 = vmatpush.bf16.msra.mxu0 %v579
        %1199 = vmatmul.bf16.gmra.mxu0 %v385
        %v1200 = vpop.f32.mrf.mxu0
        %v1201 = vadd.f32 %v653, %v1200
        %v1202 = vpop.f32.mrf.mxu0
        %v1203 = vadd.f32 %v653, %v1202
        %1204 = vmatmul.bf16.gmra.mxu0 %v388
        %v1205 = vpop.f32.mrf.mxu0
        %v1206 = vadd.f32 %v653, %v1205
        %v1207 = vpop.f32.mrf.mxu0
        %v1208 = vadd.f32 %v653, %v1207
        %1209 = vmatmul.bf16.gmra.mxu0 %v391
        %v1210 = vpop.f32.mrf.mxu0
        %v1211 = vadd.f32 %v653, %v1210
        %v1212 = vpop.f32.mrf.mxu0
        %v1213 = vadd.f32 %v653, %v1212
        %1214 = vmatmul.bf16.gmra.mxu0 %v394
        %v1215 = vpop.f32.mrf.mxu0
        %v1216 = vadd.f32 %v653, %v1215
        %v1217 = vpop.f32.mrf.mxu0
        %v1218 = vadd.f32 %v653, %v1217
        %1219 = vmatmul.bf16.gmra.mxu0 %v397
        %v1220 = vpop.f32.mrf.mxu0
        %v1221 = vadd.f32 %v653, %v1220
        %v1222 = vpop.f32.mrf.mxu0
        %v1223 = vadd.f32 %v653, %v1222
        %1224 = vmatmul.bf16.gmra.mxu0 %v400
        %v1225 = vpop.f32.mrf.mxu0
        %v1226 = vadd.f32 %v653, %v1225
        %v1227 = vpop.f32.mrf.mxu0
        %v1228 = vadd.f32 %v653, %v1227
        %1229 = vmatmul.bf16.gmra.mxu0 %v403
        %v1230 = vpop.f32.mrf.mxu0
        %v1231 = vadd.f32 %v653, %v1230
        %v1232 = vpop.f32.mrf.mxu0
        %v1233 = vadd.f32 %v653, %v1232
        %1234 = vmatmul.bf16.gmra.mxu0 %v406
        %v1235 = vpop.f32.mrf.mxu0
        %v1236 = vadd.f32 %v653, %v1235
        %v1237 = vpop.f32.mrf.mxu0
        %v1238 = vadd.f32 %v653, %v1237
        %1239 = vmatmul.bf16.gmra.mxu0 %v409
        %v1240 = vpop.f32.mrf.mxu0
        %v1241 = vadd.f32 %v653, %v1240
        %v1242 = vpop.f32.mrf.mxu0
        %v1243 = vadd.f32 %v653, %v1242
        %1244 = vmatmul.bf16.gmra.mxu0 %v412
        %v1245 = vpop.f32.mrf.mxu0
        %v1246 = vadd.f32 %v653, %v1245
        %v1247 = vpop.f32.mrf.mxu0
        %v1248 = vadd.f32 %v653, %v1247
        %1249 = vmatmul.bf16.gmra.mxu0 %v415
        %v1250 = vpop.f32.mrf.mxu0
        %v1251 = vadd.f32 %v653, %v1250
        %v1252 = vpop.f32.mrf.mxu0
        %v1253 = vadd.f32 %v653, %v1252
        %1254 = vmatmul.bf16.gmra.mxu0 %v418
        %v1255 = vpop.f32.mrf.mxu0
        %v1256 = vadd.f32 %v653, %v1255
        %v1257 = vpop.f32.mrf.mxu0
        %v1258 = vadd.f32 %v653, %v1257
        %1259 = vmatmul.bf16.gmra.mxu0 %v421
        %v1260 = vpop.f32.mrf.mxu0
        %v1261 = vadd.f32 %v653, %v1260
        %v1262 = vpop.f32.mrf.mxu0
        %v1263 = vadd.f32 %v653, %v1262
        %1264 = vmatmul.bf16.gmra.mxu0 %v424
        %v1265 = vpop.f32.mrf.mxu0
        %v1266 = vadd.f32 %v653, %v1265
        %v1267 = vpop.f32.mrf.mxu0
        %v1268 = vadd.f32 %v653, %v1267
        %1269 = vmatmul.bf16.gmra.mxu0 %v427
        %v1270 = vpop.f32.mrf.mxu0
        %v1271 = vadd.f32 %v653, %v1270
        %v1272 = vpop.f32.mrf.mxu0
        %v1273 = vadd.f32 %v653, %v1272
        %1274 = vmatmul.bf16.gmra.mxu0 %v430
        %v1275 = vpop.f32.mrf.mxu0
        %v1276 = vadd.f32 %v653, %v1275
        %v1277 = vpop.f32.mrf.mxu0
        %v1278 = vadd.f32 %v653, %v1277
        %1279 = vdwg.mxu0
        %1280 = vmatpush.bf16.msra.mxu0 %v624
        %1281 = vmatpush.bf16.msra.mxu0 %v621
        %1282 = vmatpush.bf16.msra.mxu0 %v618
        %1283 = vmatpush.bf16.msra.mxu0 %v615
        %1284 = vmatpush.bf16.msra.mxu0 %v612
        %1285 = vmatpush.bf16.msra.mxu0 %v609
        %1286 = vmatpush.bf16.msra.mxu0 %v606
        %1287 = vmatpush.bf16.msra.mxu0 %v603
        %1288 = vmatmul.bf16.gmra.mxu0 %v386
        %v1289 = vpop.f32.mrf.mxu0
        %v1290 = vadd.f32 %v1201, %v1289
        %v1291 = vpop.f32.mrf.mxu0
        %v1292 = vadd.f32 %v1203, %v1291
        %1293 = vmatmul.bf16.gmra.mxu0 %v389
        %v1294 = vpop.f32.mrf.mxu0
        %v1295 = vadd.f32 %v1206, %v1294
        %v1296 = vpop.f32.mrf.mxu0
        %v1297 = vadd.f32 %v1208, %v1296
        %1298 = vmatmul.bf16.gmra.mxu0 %v392
        %v1299 = vpop.f32.mrf.mxu0
        %v1300 = vadd.f32 %v1211, %v1299
        %v1301 = vpop.f32.mrf.mxu0
        %v1302 = vadd.f32 %v1213, %v1301
        %1303 = vmatmul.bf16.gmra.mxu0 %v395
        %v1304 = vpop.f32.mrf.mxu0
        %v1305 = vadd.f32 %v1216, %v1304
        %v1306 = vpop.f32.mrf.mxu0
        %v1307 = vadd.f32 %v1218, %v1306
        %1308 = vmatmul.bf16.gmra.mxu0 %v398
        %v1309 = vpop.f32.mrf.mxu0
        %v1310 = vadd.f32 %v1221, %v1309
        %v1311 = vpop.f32.mrf.mxu0
        %v1312 = vadd.f32 %v1223, %v1311
        %1313 = vmatmul.bf16.gmra.mxu0 %v401
        %v1314 = vpop.f32.mrf.mxu0
        %v1315 = vadd.f32 %v1226, %v1314
        %v1316 = vpop.f32.mrf.mxu0
        %v1317 = vadd.f32 %v1228, %v1316
        %1318 = vmatmul.bf16.gmra.mxu0 %v404
        %v1319 = vpop.f32.mrf.mxu0
        %v1320 = vadd.f32 %v1231, %v1319
        %v1321 = vpop.f32.mrf.mxu0
        %v1322 = vadd.f32 %v1233, %v1321
        %1323 = vmatmul.bf16.gmra.mxu0 %v407
        %v1324 = vpop.f32.mrf.mxu0
        %v1325 = vadd.f32 %v1236, %v1324
        %v1326 = vpop.f32.mrf.mxu0
        %v1327 = vadd.f32 %v1238, %v1326
        %1328 = vmatmul.bf16.gmra.mxu0 %v410
        %v1329 = vpop.f32.mrf.mxu0
        %v1330 = vadd.f32 %v1241, %v1329
        %v1331 = vpop.f32.mrf.mxu0
        %v1332 = vadd.f32 %v1243, %v1331
        %1333 = vmatmul.bf16.gmra.mxu0 %v413
        %v1334 = vpop.f32.mrf.mxu0
        %v1335 = vadd.f32 %v1246, %v1334
        %v1336 = vpop.f32.mrf.mxu0
        %v1337 = vadd.f32 %v1248, %v1336
        %1338 = vmatmul.bf16.gmra.mxu0 %v416
        %v1339 = vpop.f32.mrf.mxu0
        %v1340 = vadd.f32 %v1251, %v1339
        %v1341 = vpop.f32.mrf.mxu0
        %v1342 = vadd.f32 %v1253, %v1341
        %1343 = vmatmul.bf16.gmra.mxu0 %v419
        %v1344 = vpop.f32.mrf.mxu0
        %v1345 = vadd.f32 %v1256, %v1344
        %v1346 = vpop.f32.mrf.mxu0
        %v1347 = vadd.f32 %v1258, %v1346
        %1348 = vmatmul.bf16.gmra.mxu0 %v422
        %v1349 = vpop.f32.mrf.mxu0
        %v1350 = vadd.f32 %v1261, %v1349
        %v1351 = vpop.f32.mrf.mxu0
        %v1352 = vadd.f32 %v1263, %v1351
        %1353 = vmatmul.bf16.gmra.mxu0 %v425
        %v1354 = vpop.f32.mrf.mxu0
        %v1355 = vadd.f32 %v1266, %v1354
        %v1356 = vpop.f32.mrf.mxu0
        %v1357 = vadd.f32 %v1268, %v1356
        %1358 = vmatmul.bf16.gmra.mxu0 %v428
        %v1359 = vpop.f32.mrf.mxu0
        %v1360 = vadd.f32 %v1271, %v1359
        %v1361 = vpop.f32.mrf.mxu0
        %v1362 = vadd.f32 %v1273, %v1361
        %1363 = vmatmul.bf16.gmra.mxu0 %v431
        %v1364 = vpop.f32.mrf.mxu0
        %v1365 = vadd.f32 %v1276, %v1364
        %v1366 = vpop.f32.mrf.mxu0
        %v1367 = vadd.f32 %v1278, %v1366
        %1368 = vdwg.mxu0
        %1369 = vmatpush.bf16.msra.mxu0 %v648
        %1370 = vmatpush.bf16.msra.mxu0 %v645
        %1371 = vmatpush.bf16.msra.mxu0 %v642
        %1372 = vmatpush.bf16.msra.mxu0 %v639
        %1373 = vmatpush.bf16.msra.mxu0 %v636
        %1374 = vmatpush.bf16.msra.mxu0 %v633
        %1375 = vmatpush.bf16.msra.mxu0 %v630
        %1376 = vmatpush.bf16.msra.mxu0 %v627
        %1377 = vmatmul.bf16.gmra.mxu0 %v387
        %v1378 = vpop.f32.mrf.mxu0
        %v1379 = vadd.f32 %v1290, %v1378
        %v1380 = vpop.f32.mrf.mxu0
        %v1381 = vadd.f32 %v1292, %v1380
        %1382 = vmatmul.bf16.gmra.mxu0 %v390
        %v1383 = vpop.f32.mrf.mxu0
        %v1384 = vadd.f32 %v1295, %v1383
        %v1385 = vpop.f32.mrf.mxu0
        %v1386 = vadd.f32 %v1297, %v1385
        %1387 = vmatmul.bf16.gmra.mxu0 %v393
        %v1388 = vpop.f32.mrf.mxu0
        %v1389 = vadd.f32 %v1300, %v1388
        %v1390 = vpop.f32.mrf.mxu0
        %v1391 = vadd.f32 %v1302, %v1390
        %1392 = vmatmul.bf16.gmra.mxu0 %v396
        %v1393 = vpop.f32.mrf.mxu0
        %v1394 = vadd.f32 %v1305, %v1393
        %v1395 = vpop.f32.mrf.mxu0
        %v1396 = vadd.f32 %v1307, %v1395
        %1397 = vmatmul.bf16.gmra.mxu0 %v399
        %v1398 = vpop.f32.mrf.mxu0
        %v1399 = vadd.f32 %v1310, %v1398
        %v1400 = vpop.f32.mrf.mxu0
        %v1401 = vadd.f32 %v1312, %v1400
        %1402 = vmatmul.bf16.gmra.mxu0 %v402
        %v1403 = vpop.f32.mrf.mxu0
        %v1404 = vadd.f32 %v1315, %v1403
        %v1405 = vpop.f32.mrf.mxu0
        %v1406 = vadd.f32 %v1317, %v1405
        %1407 = vmatmul.bf16.gmra.mxu0 %v405
        %v1408 = vpop.f32.mrf.mxu0
        %v1409 = vadd.f32 %v1320, %v1408
        %v1410 = vpop.f32.mrf.mxu0
        %v1411 = vadd.f32 %v1322, %v1410
        %1412 = vmatmul.bf16.gmra.mxu0 %v408
        %v1413 = vpop.f32.mrf.mxu0
        %v1414 = vadd.f32 %v1325, %v1413
        %v1415 = vpop.f32.mrf.mxu0
        %v1416 = vadd.f32 %v1327, %v1415
        %1417 = vmatmul.bf16.gmra.mxu0 %v411
        %v1418 = vpop.f32.mrf.mxu0
        %v1419 = vadd.f32 %v1330, %v1418
        %v1420 = vpop.f32.mrf.mxu0
        %v1421 = vadd.f32 %v1332, %v1420
        %1422 = vmatmul.bf16.gmra.mxu0 %v414
        %v1423 = vpop.f32.mrf.mxu0
        %v1424 = vadd.f32 %v1335, %v1423
        %v1425 = vpop.f32.mrf.mxu0
        %v1426 = vadd.f32 %v1337, %v1425
        %1427 = vmatmul.bf16.gmra.mxu0 %v417
        %v1428 = vpop.f32.mrf.mxu0
        %v1429 = vadd.f32 %v1340, %v1428
        %v1430 = vpop.f32.mrf.mxu0
        %v1431 = vadd.f32 %v1342, %v1430
        %1432 = vmatmul.bf16.gmra.mxu0 %v420
        %v1433 = vpop.f32.mrf.mxu0
        %v1434 = vadd.f32 %v1345, %v1433
        %v1435 = vpop.f32.mrf.mxu0
        %v1436 = vadd.f32 %v1347, %v1435
        %1437 = vmatmul.bf16.gmra.mxu0 %v423
        %v1438 = vpop.f32.mrf.mxu0
        %v1439 = vadd.f32 %v1350, %v1438
        %v1440 = vpop.f32.mrf.mxu0
        %v1441 = vadd.f32 %v1352, %v1440
        %1442 = vmatmul.bf16.gmra.mxu0 %v426
        %v1443 = vpop.f32.mrf.mxu0
        %v1444 = vadd.f32 %v1355, %v1443
        %v1445 = vpop.f32.mrf.mxu0
        %v1446 = vadd.f32 %v1357, %v1445
        %1447 = vmatmul.bf16.gmra.mxu0 %v429
        %v1448 = vpop.f32.mrf.mxu0
        %v1449 = vadd.f32 %v1360, %v1448
        %v1450 = vpop.f32.mrf.mxu0
        %v1451 = vadd.f32 %v1362, %v1450
        %1452 = vmatmul.bf16.gmra.mxu0 %v432
        %v1453 = vpop.f32.mrf.mxu0
        %v1454 = vadd.f32 %v1365, %v1453
        %v1455 = vpop.f32.mrf.mxu0
        %v1456 = vadd.f32 %v1367, %v1455
        %1457 = vdwg.mxu0
        %v1458 = vpack.c.bf16 %v1112, %v845
        %v1459 = vpack.c.bf16 %v1379, %v1379
        %v1460 = vpack.c.bf16 %v1114, %v847
        %v1461 = vpack.c.bf16 %v1381, %v1381
        %v1462 = vpack.c.bf16 %v1117, %v850
        %v1463 = vpack.c.bf16 %v1384, %v1384
        %v1464 = vpack.c.bf16 %v1119, %v852
        %v1465 = vpack.c.bf16 %v1386, %v1386
        %v1466 = vpack.c.bf16 %v1122, %v855
        %v1467 = vpack.c.bf16 %v1389, %v1389
        %v1468 = vpack.c.bf16 %v1124, %v857
        %v1469 = vpack.c.bf16 %v1391, %v1391
        %v1470 = vpack.c.bf16 %v1127, %v860
        %v1471 = vpack.c.bf16 %v1394, %v1394
        %v1472 = vpack.c.bf16 %v1129, %v862
        %v1473 = vpack.c.bf16 %v1396, %v1396
        %v1474 = vpack.c.bf16 %v1132, %v865
        %v1475 = vpack.c.bf16 %v1399, %v1399
        %v1476 = vpack.c.bf16 %v1134, %v867
        %v1477 = vpack.c.bf16 %v1401, %v1401
        %v1478 = vpack.c.bf16 %v1137, %v870
        %v1479 = vpack.c.bf16 %v1404, %v1404
        %v1480 = vpack.c.bf16 %v1139, %v872
        %v1481 = vpack.c.bf16 %v1406, %v1406
        %v1482 = vpack.c.bf16 %v1142, %v875
        %v1483 = vpack.c.bf16 %v1409, %v1409
        %v1484 = vpack.c.bf16 %v1144, %v877
        %v1485 = vpack.c.bf16 %v1411, %v1411
        %v1486 = vpack.c.bf16 %v1147, %v880
        %v1487 = vpack.c.bf16 %v1414, %v1414
        %v1488 = vpack.c.bf16 %v1149, %v882
        %v1489 = vpack.c.bf16 %v1416, %v1416
        %v1490 = vpack.c.bf16 %v1152, %v885
        %v1491 = vpack.c.bf16 %v1419, %v1419
        %v1492 = vpack.c.bf16 %v1154, %v887
        %v1493 = vpack.c.bf16 %v1421, %v1421
        %v1494 = vpack.c.bf16 %v1157, %v890
        %v1495 = vpack.c.bf16 %v1424, %v1424
        %v1496 = vpack.c.bf16 %v1159, %v892
        %v1497 = vpack.c.bf16 %v1426, %v1426
        %v1498 = vpack.c.bf16 %v1162, %v895
        %v1499 = vpack.c.bf16 %v1429, %v1429
        %v1500 = vpack.c.bf16 %v1164, %v897
        %v1501 = vpack.c.bf16 %v1431, %v1431
        %v1502 = vpack.c.bf16 %v1167, %v900
        %v1503 = vpack.c.bf16 %v1434, %v1434
        %v1504 = vpack.c.bf16 %v1169, %v902
        %v1505 = vpack.c.bf16 %v1436, %v1436
        %v1506 = vpack.c.bf16 %v1172, %v905
        %v1507 = vpack.c.bf16 %v1439, %v1439
        %v1508 = vpack.c.bf16 %v1174, %v907
        %v1509 = vpack.c.bf16 %v1441, %v1441
        %v1510 = vpack.c.bf16 %v1177, %v910
        %v1511 = vpack.c.bf16 %v1444, %v1444
        %v1512 = vpack.c.bf16 %v1179, %v912
        %v1513 = vpack.c.bf16 %v1446, %v1446
        %v1514 = vpack.c.bf16 %v1182, %v915
        %v1515 = vpack.c.bf16 %v1449, %v1449
        %v1516 = vpack.c.bf16 %v1184, %v917
        %v1517 = vpack.c.bf16 %v1451, %v1451
        %v1518 = vpack.c.bf16 %v1187, %v920
        %v1519 = vpack.c.bf16 %v1454, %v1454
        %v1520 = vpack.c.bf16 %v1189, %v922
        %v1521 = vpack.c.bf16 %v1456, %v1456
        %1522 = vst [vmem:[%s283] sm:$0xff] %v1458
        %1523 = vst [vmem:[%s283 + $0x8] sm:$0xf] %v1459
        %1524 = vst [vmem:[%s283 + $0xc] sm:$0xff] %v1460
        %1525 = vst [vmem:[%s283 + $0x14] sm:$0xf] %v1461
        %1526 = vst [vmem:[%s283 + $0x18] sm:$0xff] %v1462
        %1527 = vst [vmem:[%s283 + $0x20] sm:$0xf] %v1463
        %1528 = vst [vmem:[%s283 + $0x24] sm:$0xff] %v1464
        %1529 = vst [vmem:[%s283 + $0x2c] sm:$0xf] %v1465
        %1530 = vst [vmem:[%s283 + $0x30] sm:$0xff] %v1466
        %1531 = vst [vmem:[%s283 + $0x38] sm:$0xf] %v1467
        %1532 = vst [vmem:[%s283 + $0x3c] sm:$0xff] %v1468
        %1533 = vst [vmem:[%s283 + $0x44] sm:$0xf] %v1469
        %1534 = vst [vmem:[%s283 + $0x48] sm:$0xff] %v1470
        %1535 = vst [vmem:[%s283 + $0x50] sm:$0xf] %v1471
        %1536 = vst [vmem:[%s283 + $0x54] sm:$0xff] %v1472
        %1537 = vst [vmem:[%s283 + $0x5c] sm:$0xf] %v1473
        %1538 = vst [vmem:[%s283 + $0x60] sm:$0xff] %v1474
        %1539 = vst [vmem:[%s283 + $0x68] sm:$0xf] %v1475
        %1540 = vst [vmem:[%s283 + $0x6c] sm:$0xff] %v1476
        %1541 = vst [vmem:[%s283 + $0x74] sm:$0xf] %v1477
        %1542 = vst [vmem:[%s283 + $0x78] sm:$0xff] %v1478
        %1543 = vst [vmem:[%s283 + $0x80] sm:$0xf] %v1479
        %1544 = vst [vmem:[%s283 + $0x84] sm:$0xff] %v1480
        %1545 = vst [vmem:[%s283 + $0x8c] sm:$0xf] %v1481
        %1546 = vst [vmem:[%s283 + $0x90] sm:$0xff] %v1482
        %1547 = vst [vmem:[%s283 + $0x98] sm:$0xf] %v1483
        %1548 = vst [vmem:[%s283 + $0x9c] sm:$0xff] %v1484
        %1549 = vst [vmem:[%s283 + $0xa4] sm:$0xf] %v1485
        %1550 = vst [vmem:[%s283 + $0xa8] sm:$0xff] %v1486
        %1551 = vst [vmem:[%s283 + $0xb0] sm:$0xf] %v1487
        %1552 = vst [vmem:[%s283 + $0xb4] sm:$0xff] %v1488
        %1553 = vst [vmem:[%s283 + $0xbc] sm:$0xf] %v1489
        %1554 = vst [vmem:[%s283 + $0xc0] sm:$0xff] %v1490
        %1555 = vst [vmem:[%s283 + $0xc8] sm:$0xf] %v1491
        %1556 = vst [vmem:[%s283 + $0xcc] sm:$0xff] %v1492
        %1557 = vst [vmem:[%s283 + $0xd4] sm:$0xf] %v1493
        %1558 = vst [vmem:[%s283 + $0xd8] sm:$0xff] %v1494
        %1559 = vst [vmem:[%s283 + $0xe0] sm:$0xf] %v1495
        %1560 = vst [vmem:[%s283 + $0xe4] sm:$0xff] %v1496
        %1561 = vst [vmem:[%s283 + $0xec] sm:$0xf] %v1497
        %1562 = vst [vmem:[%s283 + $0xf0] sm:$0xff] %v1498
        %1563 = vst [vmem:[%s283 + $0xf8] sm:$0xf] %v1499
        %1564 = vst [vmem:[%s283 + $0xfc] sm:$0xff] %v1500
        %1565 = vst [vmem:[%s283 + $0x104] sm:$0xf] %v1501
        %1566 = vst [vmem:[%s283 + $0x108] sm:$0xff] %v1502
        %1567 = vst [vmem:[%s283 + $0x110] sm:$0xf] %v1503
        %1568 = vst [vmem:[%s283 + $0x114] sm:$0xff] %v1504
        %1569 = vst [vmem:[%s283 + $0x11c] sm:$0xf] %v1505
        %1570 = vst [vmem:[%s283 + $0x120] sm:$0xff] %v1506
        %1571 = vst [vmem:[%s283 + $0x128] sm:$0xf] %v1507
        %1572 = vst [vmem:[%s283 + $0x12c] sm:$0xff] %v1508
        %1573 = vst [vmem:[%s283 + $0x134] sm:$0xf] %v1509
        %1574 = vst [vmem:[%s283 + $0x138] sm:$0xff] %v1510
        %1575 = vst [vmem:[%s283 + $0x140] sm:$0xf] %v1511
        %1576 = vst [vmem:[%s283 + $0x144] sm:$0xff] %v1512
        %1577 = vst [vmem:[%s283 + $0x14c] sm:$0xf] %v1513
        %1578 = vst [vmem:[%s283 + $0x150] sm:$0xff] %v1514
        %1579 = vst [vmem:[%s283 + $0x158] sm:$0xf] %v1515
        %1580 = vst [vmem:[%s283 + $0x15c] sm:$0xff] %v1516
        %1581 = vst [vmem:[%s283 + $0x164] sm:$0xf] %v1517
        %1582 = vst [vmem:[%s283 + $0x168] sm:$0xff] %v1518
        %1583 = vst [vmem:[%s283 + $0x170] sm:$0xf] %v1519
        %1584 = vst [vmem:[%s283 + $0x174] sm:$0xff] %v1520
        %1585 = vst [vmem:[%s283 + $0x17c] sm:$0xf] %v1521
        %s1586 = sand.u32 %s123, 1
        %s1587 = scalar_lea.sflag [#allocation4], %s1586
        %s1588 = sand.u32 %s123, 1
        %s1589 = smul.addr %s1588, 384
        %s1590 = scalar_lea.vmem [#allocation8], %s1589
        // Predicated region
        $region45: #{tpu_custom_call.1} parent=31 // pred_check
          %p1591 = pneg %p133
        $region46: #{tpu_custom_call.1} parent=31 // pred_check_branch
          %1593 = sbr.rel (%p1591) target = $region48
        $region47: #{tpu_custom_call.1} parent=31 // pred_region
          %s1594 = smul.u32 32, %s27
          %s1595 = smul.u32 3, %s28
          %1597 = vsyncadd %s1587, 0
          %s1598 = smul.addr %s1594, 9
          %s1599 = sadd.s32 %s1595, %s1598
          %s1600 = smul.addr %s1599, 4
          %s1601 = scalar_lea.hbm %s3, %s1600
          %s1602 = sshll.u32 %s1590, 4
          %s1603 = int_to_ptr.vmem [resolvable:$true] %s1602
          %s1604 = sshll.u32 %s1601, 4
          %s1605 = int_to_ptr.hbm [resolvable:$true] %s1604
          %1610 = dma.vmem_to_hbm [thread:$0]  %s1603, 6144, %s1605, %s1587, 192, 576, 12
        $region48: #{tpu_custom_call.1} parent=31 // pred_fallthru
          _
      $region32: #{tpu_custom_call.1} parent=5 // pred_fallthru
        _
      %p1611 = scmp.le.s32.totalorder 2, %s18
      // Predicated region
      $region49: #{tpu_custom_call.1} parent=5 // pred_check
        %p1612 = pneg %p1611
      $region50: #{tpu_custom_call.1} parent=5 // pred_check_branch
        %1614 = sbr.rel (%p1612) target = $region52
      $region51: #{tpu_custom_call.1} parent=5 // pred_region
        %s1615 = ssub.s32 %s18, 2
        // Predicated region
        $region53: #{tpu_custom_call.1} parent=51 // pred_check
          %p1616 = pneg %p139
        $region54: #{tpu_custom_call.1} parent=51 // pred_check_branch
          %1618 = sbr.rel (%p1616) target = $region56
        $region55: #{tpu_custom_call.1} parent=51 // pred_region
          %s1619 = sand.u32 %s124, 1
          %s1620 = scalar_lea.sflag [#allocation4], %s1619
          %s1621 = sand.u32 %s124, 1
          %s1622 = smul.addr %s1621, 384
          %s1623 = scalar_lea.vmem [#allocation8], %s1622
          %1625 = dma.done %s1620, 6144
        $region56: #{tpu_custom_call.1} parent=51 // pred_fallthru
          _
      $region52: #{tpu_custom_call.1} parent=5 // pred_fallthru
        _
    $region6: #{tpu_custom_call.1} parent=1 // loop_footer
      %s22 = sadd.s32 1, %s18
    $region7: #{tpu_custom_call.1} parent=1 // loop_footer_branch
      %17 = sbr.rel target = $region3
    $region8: #{tpu_custom_call.1} parent=1 // loop_exit
      _
    %1626 = vsyncpa [#allocation3], 1
    %s1627 = scalar_lea.sflag [#allocation3], 1
    %1628 = vsyncpa %s1627, 1
    %1629 = vsyncpa [#allocation6], 1
    %s1630 = scalar_lea.sflag [#allocation6], 1
    %1631 = vsyncpa %s1630, 1
    %1632 = vsyncpa [#allocation4], 1
    %s1633 = scalar_lea.sflag [#allocation4], 1
    %1634 = vsyncpa %s1633, 1

</llo_original>
